<compile_context>
chip_gen: v7x
topology: tpu7x:2x2x1
jax: 0.10.0
libtpu: 0.0.40
codegen_flags: <defaults>
</compile_context>

<pallas_src>
import math

import jax
import jax.numpy as jnp
import numpy as np
from jax.experimental import pallas as pl
from jax.experimental.pallas import tpu as pltpu


# ----------------------------------------------------------------------------
# Fused kernel: wavefront GRU recurrence over all layers + fc1/ReLU/fc2/ReLU/fc3.
# ----------------------------------------------------------------------------
def make_grunet_kernel(T, B, H, D, num_layers, C, w_info):
    H2, H3 = 2 * H, 3 * H

    def kernel(x_ref, w_ref, b_ref, out_ref):
        f32 = jnp.float32

        def wslab(name):
            r0, nr, nc = w_info[name]
            return w_ref[pl.ds(r0, nr), pl.ds(0, nc)]

        # ---- hoisted weight / bias loads (once per kernel, off the recurrence) ----
        wih = [wslab(f"wih{l}") for l in range(num_layers)]      # (d_in, 3H)
        whh = [wslab(f"whh{l}") for l in range(num_layers)]      # (H, 3H)
        w1, w2, w3 = wslab("w1"), wslab("w2"), wslab("w3")

        bias = b_ref[...]                                        # (num_layers+1, BW)
        # per-layer row: [bgi (3H) | bhn (H)]; last row: [b1 (64) | b2 (32) | b3 (C)]
        bgi_seq = bias[0:1, 0:H3]                                # layer-0 hoisted bias
        bgi_b = {l: jnp.broadcast_to(bias[l:l + 1, 0:H3], (B, H3))
                 for l in range(1, num_layers)}
        bhn_b = [jnp.broadcast_to(bias[l:l + 1, H3:H3 + H], (B, H))
                 for l in range(num_layers)]
        Lr = num_layers
        b1 = bias[Lr:Lr + 1, 0:64]
        b2 = bias[Lr:Lr + 1, 64:96]
        b3 = bias[Lr:Lr + 1, 96:96 + C]

        # ---- layer 0 input path hoisted: one MXU matmul for the whole sequence ----
        x = x_ref[...].astype(f32)                               # (T*B, D) time-major
        gi0 = jnp.dot(x, wih[0], preferred_element_type=f32) + bgi_seq   # (T*B, 3H)

        def gru_step(gi_t, h_prev, whh_l, bhn_l, first):
            # gi_t already contains b_ih + b_hh[r,z] (cuDNN-style folding);
            # b_hn must stay inside r * (h @ W_hn + b_hn) to match torch.nn.GRU.
            if first:                                            # h_prev == 0 exactly
                rz = jax.nn.sigmoid(gi_t[:, :H2])
                r, z = rz[:, :H], rz[:, H:]
                n = jnp.tanh(gi_t[:, H2:] + r * bhn_l)
                return (1.0 - z) * n
            gh = jnp.dot(h_prev, whh_l, preferred_element_type=f32)        # (B, 3H)
            rz = jax.nn.sigmoid(gi_t[:, :H2] + gh[:, :H2])      # fused r/z sigmoid
            r, z = rz[:, :H], rz[:, H:]
            n = jnp.tanh(gi_t[:, H2:] + r * (gh[:, H2:] + bhn_l))
            return (1.0 - z) * n + z * h_prev

        # ---- wavefront over (layer, time): iteration i runs layer l at t = i-l ----
        h = [None] * num_layers
        for i in range(T + num_layers - 1):                      # static unroll
            new_h = list(h)
            for l in range(num_layers):
                t = i - l
                if t < 0 or t >= T:
                    continue
                if l == 0:
                    gi_t = gi0[t * B:(t + 1) * B, :]             # static slice
                else:
                    # input = layer l-1's output at time t, i.e. h[l-1] from the
                    # previous iteration's snapshot.
                    gi_t = jnp.dot(h[l - 1], wih[l],
                                   preferred_element_type=f32) + bgi_b[l]
                new_h[l] = gru_step(gi_t, h[l], whh[l], bhn_b[l], first=(t == 0))
            h = new_h
        h_last = h[num_layers - 1]                               # (B, H)

        # ---- MLP head on the final hidden state of the last layer ----
        x1 = jnp.maximum(jnp.dot(h_last, w1, preferred_element_type=f32) + b1, 0.0)
        x2 = jnp.maximum(jnp.dot(x1, w2, preferred_element_type=f32) + b2, 0.0)
        out = jnp.dot(x2, w3, preferred_element_type=f32) + b3
        out_ref[...] = out.astype(out_ref.dtype)

    return kernel


# ----------------------------------------------------------------------------
# Wrapper: slab packing + bias folding + time-major flattening + one pallas_call.
# ----------------------------------------------------------------------------
@jax.jit
def grunet_forward(x, params):
    # x: (B, T, input_features), batch_first like the PyTorch module.
    B, T, D = x.shape
    H = params["gru"][0]["whh"].shape[0]
    num_layers = len(params["gru"])
    C = params["fc"]["w3"].shape[-1]
    H2, H3 = 2 * H, 3 * H

    # time-major flatten: step t occupies rows [t*B, (t+1)*B)
    x_tm = jnp.transpose(x, (1, 0, 2)).reshape(T * B, D)

    # ---- pack all matmul weights into one (rows, WW) slab ----
    WW = 128 * pl.cdiv(max(H3, 64, 32, C), 128)

    def pad_block(m):
        m = m.astype(jnp.float32)
        rpad = (-m.shape[0]) % 8
        return jnp.pad(m, ((0, rpad), (0, WW - m.shape[1])))

    w_info, w_blocks, row = {}, [], 0

    def add_w(name, m):
        nonlocal row
        w_info[name] = (row, m.shape[0], m.shape[1])
        mp = pad_block(m)
        w_blocks.append(mp)
        row += mp.shape[0]

    for l, p in enumerate(params["gru"]):
        add_w(f"wih{l}", p["wih"])
        add_w(f"whh{l}", p["whh"])
    add_w("w1", params["fc"]["w1"])
    add_w("w2", params["fc"]["w2"])
    add_w("w3", params["fc"]["w3"])
    w_slab = jnp.concatenate(w_blocks, axis=0)                   # (rows, WW)

    # ---- pack all biases into one (num_layers+1, BW) slab ----
    BW = 128 * pl.cdiv(max(4 * H, 64 + 32 + C), 128)

    def pad_row(r):
        return jnp.pad(r.astype(jnp.float32), ((0, 0), (0, BW - r.shape[1])))

    b_rows = []
    for p in params["gru"]:
        bih, bhh = p["bih"], p["bhh"]                            # (1, 3H), gates [r|z|n]
        # Fold b_hh's r/z parts into the input-path bias (cuDNN-style);
        # the n-gate's b_hn stays separate for r * (h @ W_hn + b_hn).
        bgi = bih + jnp.concatenate(
            [bhh[:, :H2], jnp.zeros_like(bhh[:, H2:])], axis=1)
        b_rows.append(pad_row(jnp.concatenate([bgi, bhh[:, H2:]], axis=1)))
    fc = params["fc"]
    b_rows.append(pad_row(jnp.concatenate([fc["b1"], fc["b2"], fc["b3"]], axis=1)))
    b_slab = jnp.concatenate(b_rows, axis=0)                     # (num_layers+1, BW)

    vmem = pl.BlockSpec(memory_space=pltpu.MemorySpace.VMEM)
    return pl.pallas_call(
        make_grunet_kernel(T, B, H, D, num_layers, C, w_info),
        out_shape=jax.ShapeDtypeStruct((B, C), jnp.float32),
        in_specs=[vmem, vmem, vmem],
        out_specs=vmem,
    )(x_tm, w_slab, b_slab)


# ----------------------------------------------------------------------------
# Pure-JAX reference (uses the raw, un-folded biases) for validation.
# ----------------------------------------------------------------------------
def grunet_ref(x, params):
    seq = jnp.transpose(x, (1, 0, 2))                            # (T, B, D)
    h_last = None
    for p in params["gru"]:
        H = p["whh"].shape[0]

        def step(h, x_t, p=p, H=H):
            gi = x_t @ p["wih"] + p["bih"]                       # (B, 3H)
            gh = h @ p["whh"] + p["bhh"]                         # (B, 3H)
            r = jax.nn.sigmoid(gi[:, :H] + gh[:, :H])
            z = jax.nn.sigmoid(gi[:, H:2 * H] + gh[:, H:2 * H])
            n = jnp.tanh(gi[:, 2 * H:] + r * gh[:, 2 * H:])
            h_new = (1.0 - z) * n + z * h
            return h_new, h_new

        h0 = jnp.zeros((seq.shape[1], H), jnp.float32)
        h_last, seq = jax.lax.scan(step, h0, seq)
    fc = params["fc"]
    x1 = jax.nn.relu(h_last @ fc["w1"] + fc["b1"])
    x2 = jax.nn.relu(x1 @ fc["w2"] + fc["b2"])
    return x2 @ fc["w3"] + fc["b3"]


# ----------------------------------------------------------------------------
# Deterministic parameter init (uniform +-1/sqrt(fan), like PyTorch defaults).
# Gate weights are stored pre-concatenated along the output dim: [r | z | n].
# ----------------------------------------------------------------------------
def init_params(key, input_features, hidden_dim, num_layers, num_classes):
    def uni(k, shape, scale):
        return jax.random.uniform(k, shape, jnp.float32, -scale, scale)

    keys = iter(jax.random.split(key, 4 * num_layers + 6))
    gru_layers = []
    for layer in range(num_layers):
        d_in = input_features if layer == 0 else hidden_dim
        s = 1.0 / math.sqrt(hidden_dim)
        gru_layers.append(dict(
            wih=uni(next(keys), (d_in, 3 * hidden_dim), s),
            whh=uni(next(keys), (hidden_dim, 3 * hidden_dim), s),
            bih=uni(next(keys), (1, 3 * hidden_dim), s),
            bhh=uni(next(keys), (1, 3 * hidden_dim), s),
        ))
    fc = dict(
        w1=uni(next(keys), (hidden_dim, 64), 1.0 / math.sqrt(hidden_dim)),
        b1=uni(next(keys), (1, 64), 1.0 / math.sqrt(hidden_dim)),
        w2=uni(next(keys), (64, 32), 1.0 / math.sqrt(64)),
        b2=uni(next(keys), (1, 32), 1.0 / math.sqrt(64)),
        w3=uni(next(keys), (32, num_classes), 1.0 / math.sqrt(32)),
        b3=uni(next(keys), (1, num_classes), 1.0 / math.sqrt(32)),
    )
    return dict(gru=gru_layers, fc=fc)


if __name__ == "__main__":
    B, T = 2, 8
    input_features, hidden_dim, num_layers, num_classes = 16, 32, 2, 4

    key = jax.random.PRNGKey(0)
    k_param, k_x = jax.random.split(key)
    params = init_params(k_param, input_features, hidden_dim, num_layers, num_classes)
    x = jax.random.normal(k_x, (B, T, input_features), jnp.float32)

    out = jax.block_until_ready(grunet_forward(x, params))
    ref = jax.block_until_ready(grunet_ref(x, params))

    assert out.shape == (B, num_classes)
    np.testing.assert_allclose(np.asarray(out), np.asarray(ref), rtol=1e-4, atol=1e-4)

    print("KERNEL_OK")
</pallas_src>

<mosaic_0001>
module attributes {stable_mosaic.version = 11 : i64} {
  func.func @kernel(%arg0: memref<16x16xf32, #tpu.memory_space<vmem>>, %arg1: memref<240x128xf32, #tpu.memory_space<vmem>>, %arg2: memref<3x128xf32, #tpu.memory_space<vmem>>, %arg3: memref<2x4xf32, #tpu.memory_space<vmem>>) attributes {dimension_semantics = [], scalar_prefetch = 0 : i64, scratch_operands = 0 : i64, tpu.core_type = #tpu.core_type<tc>} {
    %c0 = arith.constant 0 : index
    %c0_0 = arith.constant 0 : index
    %0 = vector.load %arg1[%c0, %c0_0] : memref<240x128xf32, #tpu.memory_space<vmem>>, vector<16x96xf32>
    %c48 = arith.constant 48 : index
    %c0_1 = arith.constant 0 : index
    %1 = vector.load %arg1[%c48, %c0_1] : memref<240x128xf32, #tpu.memory_space<vmem>>, vector<32x96xf32>
    %c16 = arith.constant 16 : index
    %c0_2 = arith.constant 0 : index
    %2 = vector.load %arg1[%c16, %c0_2] : memref<240x128xf32, #tpu.memory_space<vmem>>, vector<32x96xf32>
    %c80 = arith.constant 80 : index
    %c0_3 = arith.constant 0 : index
    %3 = vector.load %arg1[%c80, %c0_3] : memref<240x128xf32, #tpu.memory_space<vmem>>, vector<32x96xf32>
    %c112 = arith.constant 112 : index
    %c0_4 = arith.constant 0 : index
    %4 = vector.load %arg1[%c112, %c0_4] : memref<240x128xf32, #tpu.memory_space<vmem>>, vector<32x64xf32>
    %c144 = arith.constant 144 : index
    %c0_5 = arith.constant 0 : index
    %5 = vector.load %arg1[%c144, %c0_5] : memref<240x128xf32, #tpu.memory_space<vmem>>, vector<64x32xf32>
    %c208 = arith.constant 208 : index
    %c0_6 = arith.constant 0 : index
    %6 = vector.load %arg1[%c208, %c0_6] : memref<240x128xf32, #tpu.memory_space<vmem>>, vector<32x4xf32>
    %c0_7 = arith.constant 0 : index
    %c0_8 = arith.constant 0 : index
    %7 = vector.load %arg2[%c0_7, %c0_8] : memref<3x128xf32, #tpu.memory_space<vmem>>, vector<3x128xf32>
    %8 = vector.extract_strided_slice %7 {offsets = [0, 0], sizes = [1, 96], strides = [1, 1]} : vector<3x128xf32> to vector<1x96xf32>
    %9 = vector.extract_strided_slice %7 {offsets = [1, 0], sizes = [1, 96], strides = [1, 1]} : vector<3x128xf32> to vector<1x96xf32>
    %10 = vector.shape_cast %9 : vector<1x96xf32> to vector<1x96xf32>
    %11 = vector.broadcast %10 : vector<1x96xf32> to vector<2x96xf32>
    %12 = vector.extract_strided_slice %7 {offsets = [0, 96], sizes = [1, 32], strides = [1, 1]} : vector<3x128xf32> to vector<1x32xf32>
    %13 = vector.shape_cast %12 : vector<1x32xf32> to vector<1x32xf32>
    %14 = vector.broadcast %13 : vector<1x32xf32> to vector<2x32xf32>
    %15 = vector.extract_strided_slice %7 {offsets = [1, 96], sizes = [1, 32], strides = [1, 1]} : vector<3x128xf32> to vector<1x32xf32>
    %16 = vector.shape_cast %15 : vector<1x32xf32> to vector<1x32xf32>
    %17 = vector.broadcast %16 : vector<1x32xf32> to vector<2x32xf32>
    %18 = vector.extract_strided_slice %7 {offsets = [2, 0], sizes = [1, 64], strides = [1, 1]} : vector<3x128xf32> to vector<1x64xf32>
    %19 = vector.extract_strided_slice %7 {offsets = [2, 64], sizes = [1, 32], strides = [1, 1]} : vector<3x128xf32> to vector<1x32xf32>
    %20 = vector.extract_strided_slice %7 {offsets = [2, 96], sizes = [1, 4], strides = [1, 1]} : vector<3x128xf32> to vector<1x4xf32>
    %c0_9 = arith.constant 0 : index
    %c0_10 = arith.constant 0 : index
    %21 = vector.load %arg0[%c0_9, %c0_10] : memref<16x16xf32, #tpu.memory_space<vmem>>, vector<16x16xf32>
    %cst = arith.constant dense<0.000000e+00> : vector<16x96xf32>
    %22 = tpu.matmul %21, %0, %cst {dimension_numbers = #tpu.dot_dimension_numbers<[1], [0], [0], [1], [0, 0, 1, 1], [], []>} : vector<16x16xf32>, vector<16x96xf32>, vector<16x96xf32> -> vector<16x96xf32>
    %23 = vector.broadcast %8 : vector<1x96xf32> to vector<16x96xf32>
    %24 = arith.addf %22, %23 : vector<16x96xf32>
    %25 = vector.extract_strided_slice %24 {offsets = [0, 0], sizes = [2, 96], strides = [1, 1]} : vector<16x96xf32> to vector<2x96xf32>
    %26 = vector.extract_strided_slice %25 {offsets = [0, 0], sizes = [2, 64], strides = [1, 1]} : vector<2x96xf32> to vector<2x64xf32>
    %27 = arith.negf %26 : vector<2x64xf32>
    %28 = math.exp %27 : vector<2x64xf32>
    %cst_11 = arith.constant 1.000000e+00 : f32
    %29 = vector.broadcast %cst_11 : f32 to vector<2x64xf32>
    %30 = arith.addf %29, %28 : vector<2x64xf32>
    %31 = arith.divf %29, %30 : vector<2x64xf32>
    %32 = vector.extract_strided_slice %31 {offsets = [0, 0], sizes = [2, 32], strides = [1, 1]} : vector<2x64xf32> to vector<2x32xf32>
    %33 = vector.extract_strided_slice %31 {offsets = [0, 32], sizes = [2, 32], strides = [1, 1]} : vector<2x64xf32> to vector<2x32xf32>
    %34 = vector.extract_strided_slice %25 {offsets = [0, 64], sizes = [2, 32], strides = [1, 1]} : vector<2x96xf32> to vector<2x32xf32>
    %35 = arith.mulf %32, %14 : vector<2x32xf32>
    %36 = arith.addf %34, %35 : vector<2x32xf32>
    %37 = math.tanh %36 : vector<2x32xf32>
    %cst_12 = arith.constant 1.000000e+00 : f32
    %38 = vector.broadcast %cst_12 : f32 to vector<2x32xf32>
    %39 = arith.subf %38, %33 : vector<2x32xf32>
    %40 = arith.mulf %39, %37 : vector<2x32xf32>
    %41 = vector.extract_strided_slice %24 {offsets = [2, 0], sizes = [2, 96], strides = [1, 1]} : vector<16x96xf32> to vector<2x96xf32>
    %cst_13 = arith.constant dense<0.000000e+00> : vector<2x96xf32>
    %42 = tpu.matmul %40, %2, %cst_13 {dimension_numbers = #tpu.dot_dimension_numbers<[1], [0], [0], [1], [0, 0, 1, 1], [], []>} : vector<2x32xf32>, vector<32x96xf32>, vector<2x96xf32> -> vector<2x96xf32>
    %43 = vector.extract_strided_slice %41 {offsets = [0, 0], sizes = [2, 64], strides = [1, 1]} : vector<2x96xf32> to vector<2x64xf32>
    %44 = vector.extract_strided_slice %42 {offsets = [0, 0], sizes = [2, 64], strides = [1, 1]} : vector<2x96xf32> to vector<2x64xf32>
    %45 = arith.addf %43, %44 : vector<2x64xf32>
    %46 = arith.negf %45 : vector<2x64xf32>
    %47 = math.exp %46 : vector<2x64xf32>
    %cst_14 = arith.constant 1.000000e+00 : f32
    %48 = vector.broadcast %cst_14 : f32 to vector<2x64xf32>
    %49 = arith.addf %48, %47 : vector<2x64xf32>
    %50 = arith.divf %48, %49 : vector<2x64xf32>
    %51 = vector.extract_strided_slice %50 {offsets = [0, 0], sizes = [2, 32], strides = [1, 1]} : vector<2x64xf32> to vector<2x32xf32>
    %52 = vector.extract_strided_slice %50 {offsets = [0, 32], sizes = [2, 32], strides = [1, 1]} : vector<2x64xf32> to vector<2x32xf32>
    %53 = vector.extract_strided_slice %41 {offsets = [0, 64], sizes = [2, 32], strides = [1, 1]} : vector<2x96xf32> to vector<2x32xf32>
    %54 = vector.extract_strided_slice %42 {offsets = [0, 64], sizes = [2, 32], strides = [1, 1]} : vector<2x96xf32> to vector<2x32xf32>
    %55 = arith.addf %54, %14 : vector<2x32xf32>
    %56 = arith.mulf %51, %55 : vector<2x32xf32>
    %57 = arith.addf %53, %56 : vector<2x32xf32>
    %58 = math.tanh %57 : vector<2x32xf32>
    %cst_15 = arith.constant 1.000000e+00 : f32
    %59 = vector.broadcast %cst_15 : f32 to vector<2x32xf32>
    %60 = arith.subf %59, %52 : vector<2x32xf32>
    %61 = arith.mulf %60, %58 : vector<2x32xf32>
    %62 = arith.mulf %52, %40 : vector<2x32xf32>
    %63 = arith.addf %61, %62 : vector<2x32xf32>
    %cst_16 = arith.constant dense<0.000000e+00> : vector<2x96xf32>
    %64 = tpu.matmul %40, %1, %cst_16 {dimension_numbers = #tpu.dot_dimension_numbers<[1], [0], [0], [1], [0, 0, 1, 1], [], []>} : vector<2x32xf32>, vector<32x96xf32>, vector<2x96xf32> -> vector<2x96xf32>
    %65 = arith.addf %64, %11 : vector<2x96xf32>
    %66 = vector.extract_strided_slice %65 {offsets = [0, 0], sizes = [2, 64], strides = [1, 1]} : vector<2x96xf32> to vector<2x64xf32>
    %67 = arith.negf %66 : vector<2x64xf32>
    %68 = math.exp %67 : vector<2x64xf32>
    %cst_17 = arith.constant 1.000000e+00 : f32
    %69 = vector.broadcast %cst_17 : f32 to vector<2x64xf32>
    %70 = arith.addf %69, %68 : vector<2x64xf32>
    %71 = arith.divf %69, %70 : vector<2x64xf32>
    %72 = vector.extract_strided_slice %71 {offsets = [0, 0], sizes = [2, 32], strides = [1, 1]} : vector<2x64xf32> to vector<2x32xf32>
    %73 = vector.extract_strided_slice %71 {offsets = [0, 32], sizes = [2, 32], strides = [1, 1]} : vector<2x64xf32> to vector<2x32xf32>
    %74 = vector.extract_strided_slice %65 {offsets = [0, 64], sizes = [2, 32], strides = [1, 1]} : vector<2x96xf32> to vector<2x32xf32>
    %75 = arith.mulf %72, %17 : vector<2x32xf32>
    %76 = arith.addf %74, %75 : vector<2x32xf32>
    %77 = math.tanh %76 : vector<2x32xf32>
    %cst_18 = arith.constant 1.000000e+00 : f32
    %78 = vector.broadcast %cst_18 : f32 to vector<2x32xf32>
    %79 = arith.subf %78, %73 : vector<2x32xf32>
    %80 = arith.mulf %79, %77 : vector<2x32xf32>
    %81 = vector.extract_strided_slice %24 {offsets = [4, 0], sizes = [2, 96], strides = [1, 1]} : vector<16x96xf32> to vector<2x96xf32>
    %cst_19 = arith.constant dense<0.000000e+00> : vector<2x96xf32>
    %82 = tpu.matmul %63, %2, %cst_19 {dimension_numbers = #tpu.dot_dimension_numbers<[1], [0], [0], [1], [0, 0, 1, 1], [], []>} : vector<2x32xf32>, vector<32x96xf32>, vector<2x96xf32> -> vector<2x96xf32>
    %83 = vector.extract_strided_slice %81 {offsets = [0, 0], sizes = [2, 64], strides = [1, 1]} : vector<2x96xf32> to vector<2x64xf32>
    %84 = vector.extract_strided_slice %82 {offsets = [0, 0], sizes = [2, 64], strides = [1, 1]} : vector<2x96xf32> to vector<2x64xf32>
    %85 = arith.addf %83, %84 : vector<2x64xf32>
    %86 = arith.negf %85 : vector<2x64xf32>
    %87 = math.exp %86 : vector<2x64xf32>
    %cst_20 = arith.constant 1.000000e+00 : f32
    %88 = vector.broadcast %cst_20 : f32 to vector<2x64xf32>
    %89 = arith.addf %88, %87 : vector<2x64xf32>
    %90 = arith.divf %88, %89 : vector<2x64xf32>
    %91 = vector.extract_strided_slice %90 {offsets = [0, 0], sizes = [2, 32], strides = [1, 1]} : vector<2x64xf32> to vector<2x32xf32>
    %92 = vector.extract_strided_slice %90 {offsets = [0, 32], sizes = [2, 32], strides = [1, 1]} : vector<2x64xf32> to vector<2x32xf32>
    %93 = vector.extract_strided_slice %81 {offsets = [0, 64], sizes = [2, 32], strides = [1, 1]} : vector<2x96xf32> to vector<2x32xf32>
    %94 = vector.extract_strided_slice %82 {offsets = [0, 64], sizes = [2, 32], strides = [1, 1]} : vector<2x96xf32> to vector<2x32xf32>
    %95 = arith.addf %94, %14 : vector<2x32xf32>
    %96 = arith.mulf %91, %95 : vector<2x32xf32>
    %97 = arith.addf %93, %96 : vector<2x32xf32>
    %98 = math.tanh %97 : vector<2x32xf32>
    %cst_21 = arith.constant 1.000000e+00 : f32
    %99 = vector.broadcast %cst_21 : f32 to vector<2x32xf32>
    %100 = arith.subf %99, %92 : vector<2x32xf32>
    %101 = arith.mulf %100, %98 : vector<2x32xf32>
    %102 = arith.mulf %92, %63 : vector<2x32xf32>
    %103 = arith.addf %101, %102 : vector<2x32xf32>
    %cst_22 = arith.constant dense<0.000000e+00> : vector<2x96xf32>
    %104 = tpu.matmul %63, %1, %cst_22 {dimension_numbers = #tpu.dot_dimension_numbers<[1], [0], [0], [1], [0, 0, 1, 1], [], []>} : vector<2x32xf32>, vector<32x96xf32>, vector<2x96xf32> -> vector<2x96xf32>
    %105 = arith.addf %104, %11 : vector<2x96xf32>
    %cst_23 = arith.constant dense<0.000000e+00> : vector<2x96xf32>
    %106 = tpu.matmul %80, %3, %cst_23 {dimension_numbers = #tpu.dot_dimension_numbers<[1], [0], [0], [1], [0, 0, 1, 1], [], []>} : vector<2x32xf32>, vector<32x96xf32>, vector<2x96xf32> -> vector<2x96xf32>
    %107 = vector.extract_strided_slice %105 {offsets = [0, 0], sizes = [2, 64], strides = [1, 1]} : vector<2x96xf32> to vector<2x64xf32>
    %108 = vector.extract_strided_slice %106 {offsets = [0, 0], sizes = [2, 64], strides = [1, 1]} : vector<2x96xf32> to vector<2x64xf32>
    %109 = arith.addf %107, %108 : vector<2x64xf32>
    %110 = arith.negf %109 : vector<2x64xf32>
    %111 = math.exp %110 : vector<2x64xf32>
    %cst_24 = arith.constant 1.000000e+00 : f32
    %112 = vector.broadcast %cst_24 : f32 to vector<2x64xf32>
    %113 = arith.addf %112, %111 : vector<2x64xf32>
    %114 = arith.divf %112, %113 : vector<2x64xf32>
    %115 = vector.extract_strided_slice %114 {offsets = [0, 0], sizes = [2, 32], strides = [1, 1]} : vector<2x64xf32> to vector<2x32xf32>
    %116 = vector.extract_strided_slice %114 {offsets = [0, 32], sizes = [2, 32], strides = [1, 1]} : vector<2x64xf32> to vector<2x32xf32>
    %117 = vector.extract_strided_slice %105 {offsets = [0, 64], sizes = [2, 32], strides = [1, 1]} : vector<2x96xf32> to vector<2x32xf32>
    %118 = vector.extract_strided_slice %106 {offsets = [0, 64], sizes = [2, 32], strides = [1, 1]} : vector<2x96xf32> to vector<2x32xf32>
    %119 = arith.addf %118, %17 : vector<2x32xf32>
    %120 = arith.mulf %115, %119 : vector<2x32xf32>
    %121 = arith.addf %117, %120 : vector<2x32xf32>
    %122 = math.tanh %121 : vector<2x32xf32>
    %cst_25 = arith.constant 1.000000e+00 : f32
    %123 = vector.broadcast %cst_25 : f32 to vector<2x32xf32>
    %124 = arith.subf %123, %116 : vector<2x32xf32>
    %125 = arith.mulf %124, %122 : vector<2x32xf32>
    %126 = arith.mulf %116, %80 : vector<2x32xf32>
    %127 = arith.addf %125, %126 : vector<2x32xf32>
    %128 = vector.extract_strided_slice %24 {offsets = [6, 0], sizes = [2, 96], strides = [1, 1]} : vector<16x96xf32> to vector<2x96xf32>
    %cst_26 = arith.constant dense<0.000000e+00> : vector<2x96xf32>
    %129 = tpu.matmul %103, %2, %cst_26 {dimension_numbers = #tpu.dot_dimension_numbers<[1], [0], [0], [1], [0, 0, 1, 1], [], []>} : vector<2x32xf32>, vector<32x96xf32>, vector<2x96xf32> -> vector<2x96xf32>
    %130 = vector.extract_strided_slice %128 {offsets = [0, 0], sizes = [2, 64], strides = [1, 1]} : vector<2x96xf32> to vector<2x64xf32>
    %131 = vector.extract_strided_slice %129 {offsets = [0, 0], sizes = [2, 64], strides = [1, 1]} : vector<2x96xf32> to vector<2x64xf32>
    %132 = arith.addf %130, %131 : vector<2x64xf32>
    %133 = arith.negf %132 : vector<2x64xf32>
    %134 = math.exp %133 : vector<2x64xf32>
    %cst_27 = arith.constant 1.000000e+00 : f32
    %135 = vector.broadcast %cst_27 : f32 to vector<2x64xf32>
    %136 = arith.addf %135, %134 : vector<2x64xf32>
    %137 = arith.divf %135, %136 : vector<2x64xf32>
    %138 = vector.extract_strided_slice %137 {offsets = [0, 0], sizes = [2, 32], strides = [1, 1]} : vector<2x64xf32> to vector<2x32xf32>
    %139 = vector.extract_strided_slice %137 {offsets = [0, 32], sizes = [2, 32], strides = [1, 1]} : vector<2x64xf32> to vector<2x32xf32>
    %140 = vector.extract_strided_slice %128 {offsets = [0, 64], sizes = [2, 32], strides = [1, 1]} : vector<2x96xf32> to vector<2x32xf32>
    %141 = vector.extract_strided_slice %129 {offsets = [0, 64], sizes = [2, 32], strides = [1, 1]} : vector<2x96xf32> to vector<2x32xf32>
    %142 = arith.addf %141, %14 : vector<2x32xf32>
    %143 = arith.mulf %138, %142 : vector<2x32xf32>
    %144 = arith.addf %140, %143 : vector<2x32xf32>
    %145 = math.tanh %144 : vector<2x32xf32>
    %cst_28 = arith.constant 1.000000e+00 : f32
    %146 = vector.broadcast %cst_28 : f32 to vector<2x32xf32>
    %147 = arith.subf %146, %139 : vector<2x32xf32>
    %148 = arith.mulf %147, %145 : vector<2x32xf32>
    %149 = arith.mulf %139, %103 : vector<2x32xf32>
    %150 = arith.addf %148, %149 : vector<2x32xf32>
    %cst_29 = arith.constant dense<0.000000e+00> : vector<2x96xf32>
    %151 = tpu.matmul %103, %1, %cst_29 {dimension_numbers = #tpu.dot_dimension_numbers<[1], [0], [0], [1], [0, 0, 1, 1], [], []>} : vector<2x32xf32>, vector<32x96xf32>, vector<2x96xf32> -> vector<2x96xf32>
    %152 = arith.addf %151, %11 : vector<2x96xf32>
    %cst_30 = arith.constant dense<0.000000e+00> : vector<2x96xf32>
    %153 = tpu.matmul %127, %3, %cst_30 {dimension_numbers = #tpu.dot_dimension_numbers<[1], [0], [0], [1], [0, 0, 1, 1], [], []>} : vector<2x32xf32>, vector<32x96xf32>, vector<2x96xf32> -> vector<2x96xf32>
    %154 = vector.extract_strided_slice %152 {offsets = [0, 0], sizes = [2, 64], strides = [1, 1]} : vector<2x96xf32> to vector<2x64xf32>
    %155 = vector.extract_strided_slice %153 {offsets = [0, 0], sizes = [2, 64], strides = [1, 1]} : vector<2x96xf32> to vector<2x64xf32>
    %156 = arith.addf %154, %155 : vector<2x64xf32>
    %157 = arith.negf %156 : vector<2x64xf32>
    %158 = math.exp %157 : vector<2x64xf32>
    %cst_31 = arith.constant 1.000000e+00 : f32
    %159 = vector.broadcast %cst_31 : f32 to vector<2x64xf32>
    %160 = arith.addf %159, %158 : vector<2x64xf32>
    %161 = arith.divf %159, %160 : vector<2x64xf32>
    %162 = vector.extract_strided_slice %161 {offsets = [0, 0], sizes = [2, 32], strides = [1, 1]} : vector<2x64xf32> to vector<2x32xf32>
    %163 = vector.extract_strided_slice %161 {offsets = [0, 32], sizes = [2, 32], strides = [1, 1]} : vector<2x64xf32> to vector<2x32xf32>
    %164 = vector.extract_strided_slice %152 {offsets = [0, 64], sizes = [2, 32], strides = [1, 1]} : vector<2x96xf32> to vector<2x32xf32>
    %165 = vector.extract_strided_slice %153 {offsets = [0, 64], sizes = [2, 32], strides = [1, 1]} : vector<2x96xf32> to vector<2x32xf32>
    %166 = arith.addf %165, %17 : vector<2x32xf32>
    %167 = arith.mulf %162, %166 : vector<2x32xf32>
    %168 = arith.addf %164, %167 : vector<2x32xf32>
    %169 = math.tanh %168 : vector<2x32xf32>
    %cst_32 = arith.constant 1.000000e+00 : f32
    %170 = vector.broadcast %cst_32 : f32 to vector<2x32xf32>
    %171 = arith.subf %170, %163 : vector<2x32xf32>
    %172 = arith.mulf %171, %169 : vector<2x32xf32>
    %173 = arith.mulf %163, %127 : vector<2x32xf32>
    %174 = arith.addf %172, %173 : vector<2x32xf32>
    %175 = vector.extract_strided_slice %24 {offsets = [8, 0], sizes = [2, 96], strides = [1, 1]} : vector<16x96xf32> to vector<2x96xf32>
    %cst_33 = arith.constant dense<0.000000e+00> : vector<2x96xf32>
    %176 = tpu.matmul %150, %2, %cst_33 {dimension_numbers = #tpu.dot_dimension_numbers<[1], [0], [0], [1], [0, 0, 1, 1], [], []>} : vector<2x32xf32>, vector<32x96xf32>, vector<2x96xf32> -> vector<2x96xf32>
    %177 = vector.extract_strided_slice %175 {offsets = [0, 0], sizes = [2, 64], strides = [1, 1]} : vector<2x96xf32> to vector<2x64xf32>
    %178 = vector.extract_strided_slice %176 {offsets = [0, 0], sizes = [2, 64], strides = [1, 1]} : vector<2x96xf32> to vector<2x64xf32>
    %179 = arith.addf %177, %178 : vector<2x64xf32>
    %180 = arith.negf %179 : vector<2x64xf32>
    %181 = math.exp %180 : vector<2x64xf32>
    %cst_34 = arith.constant 1.000000e+00 : f32
    %182 = vector.broadcast %cst_34 : f32 to vector<2x64xf32>
    %183 = arith.addf %182, %181 : vector<2x64xf32>
    %184 = arith.divf %182, %183 : vector<2x64xf32>
    %185 = vector.extract_strided_slice %184 {offsets = [0, 0], sizes = [2, 32], strides = [1, 1]} : vector<2x64xf32> to vector<2x32xf32>
    %186 = vector.extract_strided_slice %184 {offsets = [0, 32], sizes = [2, 32], strides = [1, 1]} : vector<2x64xf32> to vector<2x32xf32>
    %187 = vector.extract_strided_slice %175 {offsets = [0, 64], sizes = [2, 32], strides = [1, 1]} : vector<2x96xf32> to vector<2x32xf32>
    %188 = vector.extract_strided_slice %176 {offsets = [0, 64], sizes = [2, 32], strides = [1, 1]} : vector<2x96xf32> to vector<2x32xf32>
    %189 = arith.addf %188, %14 : vector<2x32xf32>
    %190 = arith.mulf %185, %189 : vector<2x32xf32>
    %191 = arith.addf %187, %190 : vector<2x32xf32>
    %192 = math.tanh %191 : vector<2x32xf32>
    %cst_35 = arith.constant 1.000000e+00 : f32
    %193 = vector.broadcast %cst_35 : f32 to vector<2x32xf32>
    %194 = arith.subf %193, %186 : vector<2x32xf32>
    %195 = arith.mulf %194, %192 : vector<2x32xf32>
    %196 = arith.mulf %186, %150 : vector<2x32xf32>
    %197 = arith.addf %195, %196 : vector<2x32xf32>
    %cst_36 = arith.constant dense<0.000000e+00> : vector<2x96xf32>
    %198 = tpu.matmul %150, %1, %cst_36 {dimension_numbers = #tpu.dot_dimension_numbers<[1], [0], [0], [1], [0, 0, 1, 1], [], []>} : vector<2x32xf32>, vector<32x96xf32>, vector<2x96xf32> -> vector<2x96xf32>
    %199 = arith.addf %198, %11 : vector<2x96xf32>
    %cst_37 = arith.constant dense<0.000000e+00> : vector<2x96xf32>
    %200 = tpu.matmul %174, %3, %cst_37 {dimension_numbers = #tpu.dot_dimension_numbers<[1], [0], [0], [1], [0, 0, 1, 1], [], []>} : vector<2x32xf32>, vector<32x96xf32>, vector<2x96xf32> -> vector<2x96xf32>
    %201 = vector.extract_strided_slice %199 {offsets = [0, 0], sizes = [2, 64], strides = [1, 1]} : vector<2x96xf32> to vector<2x64xf32>
    %202 = vector.extract_strided_slice %200 {offsets = [0, 0], sizes = [2, 64], strides = [1, 1]} : vector<2x96xf32> to vector<2x64xf32>
    %203 = arith.addf %201, %202 : vector<2x64xf32>
    %204 = arith.negf %203 : vector<2x64xf32>
    %205 = math.exp %204 : vector<2x64xf32>
    %cst_38 = arith.constant 1.000000e+00 : f32
    %206 = vector.broadcast %cst_38 : f32 to vector<2x64xf32>
    %207 = arith.addf %206, %205 : vector<2x64xf32>
    %208 = arith.divf %206, %207 : vector<2x64xf32>
    %209 = vector.extract_strided_slice %208 {offsets = [0, 0], sizes = [2, 32], strides = [1, 1]} : vector<2x64xf32> to vector<2x32xf32>
    %210 = vector.extract_strided_slice %208 {offsets = [0, 32], sizes = [2, 32], strides = [1, 1]} : vector<2x64xf32> to vector<2x32xf32>
    %211 = vector.extract_strided_slice %199 {offsets = [0, 64], sizes = [2, 32], strides = [1, 1]} : vector<2x96xf32> to vector<2x32xf32>
    %212 = vector.extract_strided_slice %200 {offsets = [0, 64], sizes = [2, 32], strides = [1, 1]} : vector<2x96xf32> to vector<2x32xf32>
    %213 = arith.addf %212, %17 : vector<2x32xf32>
    %214 = arith.mulf %209, %213 : vector<2x32xf32>
    %215 = arith.addf %211, %214 : vector<2x32xf32>
    %216 = math.tanh %215 : vector<2x32xf32>
    %cst_39 = arith.constant 1.000000e+00 : f32
    %217 = vector.broadcast %cst_39 : f32 to vector<2x32xf32>
    %218 = arith.subf %217, %210 : vector<2x32xf32>
    %219 = arith.mulf %218, %216 : vector<2x32xf32>
    %220 = arith.mulf %210, %174 : vector<2x32xf32>
    %221 = arith.addf %219, %220 : vector<2x32xf32>
    %222 = vector.extract_strided_slice %24 {offsets = [10, 0], sizes = [2, 96], strides = [1, 1]} : vector<16x96xf32> to vector<2x96xf32>
    %cst_40 = arith.constant dense<0.000000e+00> : vector<2x96xf32>
    %223 = tpu.matmul %197, %2, %cst_40 {dimension_numbers = #tpu.dot_dimension_numbers<[1], [0], [0], [1], [0, 0, 1, 1], [], []>} : vector<2x32xf32>, vector<32x96xf32>, vector<2x96xf32> -> vector<2x96xf32>
    %224 = vector.extract_strided_slice %222 {offsets = [0, 0], sizes = [2, 64], strides = [1, 1]} : vector<2x96xf32> to vector<2x64xf32>
    %225 = vector.extract_strided_slice %223 {offsets = [0, 0], sizes = [2, 64], strides = [1, 1]} : vector<2x96xf32> to vector<2x64xf32>
    %226 = arith.addf %224, %225 : vector<2x64xf32>
    %227 = arith.negf %226 : vector<2x64xf32>
    %228 = math.exp %227 : vector<2x64xf32>
    %cst_41 = arith.constant 1.000000e+00 : f32
    %229 = vector.broadcast %cst_41 : f32 to vector<2x64xf32>
    %230 = arith.addf %229, %228 : vector<2x64xf32>
    %231 = arith.divf %229, %230 : vector<2x64xf32>
    %232 = vector.extract_strided_slice %231 {offsets = [0, 0], sizes = [2, 32], strides = [1, 1]} : vector<2x64xf32> to vector<2x32xf32>
    %233 = vector.extract_strided_slice %231 {offsets = [0, 32], sizes = [2, 32], strides = [1, 1]} : vector<2x64xf32> to vector<2x32xf32>
    %234 = vector.extract_strided_slice %222 {offsets = [0, 64], sizes = [2, 32], strides = [1, 1]} : vector<2x96xf32> to vector<2x32xf32>
    %235 = vector.extract_strided_slice %223 {offsets = [0, 64], sizes = [2, 32], strides = [1, 1]} : vector<2x96xf32> to vector<2x32xf32>
    %236 = arith.addf %235, %14 : vector<2x32xf32>
    %237 = arith.mulf %232, %236 : vector<2x32xf32>
    %238 = arith.addf %234, %237 : vector<2x32xf32>
    %239 = math.tanh %238 : vector<2x32xf32>
    %cst_42 = arith.constant 1.000000e+00 : f32
    %240 = vector.broadcast %cst_42 : f32 to vector<2x32xf32>
    %241 = arith.subf %240, %233 : vector<2x32xf32>
    %242 = arith.mulf %241, %239 : vector<2x32xf32>
    %243 = arith.mulf %233, %197 : vector<2x32xf32>
    %244 = arith.addf %242, %243 : vector<2x32xf32>
    %cst_43 = arith.constant dense<0.000000e+00> : vector<2x96xf32>
    %245 = tpu.matmul %197, %1, %cst_43 {dimension_numbers = #tpu.dot_dimension_numbers<[1], [0], [0], [1], [0, 0, 1, 1], [], []>} : vector<2x32xf32>, vector<32x96xf32>, vector<2x96xf32> -> vector<2x96xf32>
    %246 = arith.addf %245, %11 : vector<2x96xf32>
    %cst_44 = arith.constant dense<0.000000e+00> : vector<2x96xf32>
    %247 = tpu.matmul %221, %3, %cst_44 {dimension_numbers = #tpu.dot_dimension_numbers<[1], [0], [0], [1], [0, 0, 1, 1], [], []>} : vector<2x32xf32>, vector<32x96xf32>, vector<2x96xf32> -> vector<2x96xf32>
    %248 = vector.extract_strided_slice %246 {offsets = [0, 0], sizes = [2, 64], strides = [1, 1]} : vector<2x96xf32> to vector<2x64xf32>
    %249 = vector.extract_strided_slice %247 {offsets = [0, 0], sizes = [2, 64], strides = [1, 1]} : vector<2x96xf32> to vector<2x64xf32>
    %250 = arith.addf %248, %249 : vector<2x64xf32>
    %251 = arith.negf %250 : vector<2x64xf32>
    %252 = math.exp %251 : vector<2x64xf32>
    %cst_45 = arith.constant 1.000000e+00 : f32
    %253 = vector.broadcast %cst_45 : f32 to vector<2x64xf32>
    %254 = arith.addf %253, %252 : vector<2x64xf32>
    %255 = arith.divf %253, %254 : vector<2x64xf32>
    %256 = vector.extract_strided_slice %255 {offsets = [0, 0], sizes = [2, 32], strides = [1, 1]} : vector<2x64xf32> to vector<2x32xf32>
    %257 = vector.extract_strided_slice %255 {offsets = [0, 32], sizes = [2, 32], strides = [1, 1]} : vector<2x64xf32> to vector<2x32xf32>
    %258 = vector.extract_strided_slice %246 {offsets = [0, 64], sizes = [2, 32], strides = [1, 1]} : vector<2x96xf32> to vector<2x32xf32>
    %259 = vector.extract_strided_slice %247 {offsets = [0, 64], sizes = [2, 32], strides = [1, 1]} : vector<2x96xf32> to vector<2x32xf32>
    %260 = arith.addf %259, %17 : vector<2x32xf32>
    %261 = arith.mulf %256, %260 : vector<2x32xf32>
    %262 = arith.addf %258, %261 : vector<2x32xf32>
    %263 = math.tanh %262 : vector<2x32xf32>
    %cst_46 = arith.constant 1.000000e+00 : f32
    %264 = vector.broadcast %cst_46 : f32 to vector<2x32xf32>
    %265 = arith.subf %264, %257 : vector<2x32xf32>
    %266 = arith.mulf %265, %263 : vector<2x32xf32>
    %267 = arith.mulf %257, %221 : vector<2x32xf32>
    %268 = arith.addf %266, %267 : vector<2x32xf32>
    %269 = vector.extract_strided_slice %24 {offsets = [12, 0], sizes = [2, 96], strides = [1, 1]} : vector<16x96xf32> to vector<2x96xf32>
    %cst_47 = arith.constant dense<0.000000e+00> : vector<2x96xf32>
    %270 = tpu.matmul %244, %2, %cst_47 {dimension_numbers = #tpu.dot_dimension_numbers<[1], [0], [0], [1], [0, 0, 1, 1], [], []>} : vector<2x32xf32>, vector<32x96xf32>, vector<2x96xf32> -> vector<2x96xf32>
    %271 = vector.extract_strided_slice %269 {offsets = [0, 0], sizes = [2, 64], strides = [1, 1]} : vector<2x96xf32> to vector<2x64xf32>
    %272 = vector.extract_strided_slice %270 {offsets = [0, 0], sizes = [2, 64], strides = [1, 1]} : vector<2x96xf32> to vector<2x64xf32>
    %273 = arith.addf %271, %272 : vector<2x64xf32>
    %274 = arith.negf %273 : vector<2x64xf32>
    %275 = math.exp %274 : vector<2x64xf32>
    %cst_48 = arith.constant 1.000000e+00 : f32
    %276 = vector.broadcast %cst_48 : f32 to vector<2x64xf32>
    %277 = arith.addf %276, %275 : vector<2x64xf32>
    %278 = arith.divf %276, %277 : vector<2x64xf32>
    %279 = vector.extract_strided_slice %278 {offsets = [0, 0], sizes = [2, 32], strides = [1, 1]} : vector<2x64xf32> to vector<2x32xf32>
    %280 = vector.extract_strided_slice %278 {offsets = [0, 32], sizes = [2, 32], strides = [1, 1]} : vector<2x64xf32> to vector<2x32xf32>
    %281 = vector.extract_strided_slice %269 {offsets = [0, 64], sizes = [2, 32], strides = [1, 1]} : vector<2x96xf32> to vector<2x32xf32>
    %282 = vector.extract_strided_slice %270 {offsets = [0, 64], sizes = [2, 32], strides = [1, 1]} : vector<2x96xf32> to vector<2x32xf32>
    %283 = arith.addf %282, %14 : vector<2x32xf32>
    %284 = arith.mulf %279, %283 : vector<2x32xf32>
    %285 = arith.addf %281, %284 : vector<2x32xf32>
    %286 = math.tanh %285 : vector<2x32xf32>
    %cst_49 = arith.constant 1.000000e+00 : f32
    %287 = vector.broadcast %cst_49 : f32 to vector<2x32xf32>
    %288 = arith.subf %287, %280 : vector<2x32xf32>
    %289 = arith.mulf %288, %286 : vector<2x32xf32>
    %290 = arith.mulf %280, %244 : vector<2x32xf32>
    %291 = arith.addf %289, %290 : vector<2x32xf32>
    %cst_50 = arith.constant dense<0.000000e+00> : vector<2x96xf32>
    %292 = tpu.matmul %244, %1, %cst_50 {dimension_numbers = #tpu.dot_dimension_numbers<[1], [0], [0], [1], [0, 0, 1, 1], [], []>} : vector<2x32xf32>, vector<32x96xf32>, vector<2x96xf32> -> vector<2x96xf32>
    %293 = arith.addf %292, %11 : vector<2x96xf32>
    %cst_51 = arith.constant dense<0.000000e+00> : vector<2x96xf32>
    %294 = tpu.matmul %268, %3, %cst_51 {dimension_numbers = #tpu.dot_dimension_numbers<[1], [0], [0], [1], [0, 0, 1, 1], [], []>} : vector<2x32xf32>, vector<32x96xf32>, vector<2x96xf32> -> vector<2x96xf32>
    %295 = vector.extract_strided_slice %293 {offsets = [0, 0], sizes = [2, 64], strides = [1, 1]} : vector<2x96xf32> to vector<2x64xf32>
    %296 = vector.extract_strided_slice %294 {offsets = [0, 0], sizes = [2, 64], strides = [1, 1]} : vector<2x96xf32> to vector<2x64xf32>
    %297 = arith.addf %295, %296 : vector<2x64xf32>
    %298 = arith.negf %297 : vector<2x64xf32>
    %299 = math.exp %298 : vector<2x64xf32>
    %cst_52 = arith.constant 1.000000e+00 : f32
    %300 = vector.broadcast %cst_52 : f32 to vector<2x64xf32>
    %301 = arith.addf %300, %299 : vector<2x64xf32>
    %302 = arith.divf %300, %301 : vector<2x64xf32>
    %303 = vector.extract_strided_slice %302 {offsets = [0, 0], sizes = [2, 32], strides = [1, 1]} : vector<2x64xf32> to vector<2x32xf32>
    %304 = vector.extract_strided_slice %302 {offsets = [0, 32], sizes = [2, 32], strides = [1, 1]} : vector<2x64xf32> to vector<2x32xf32>
    %305 = vector.extract_strided_slice %293 {offsets = [0, 64], sizes = [2, 32], strides = [1, 1]} : vector<2x96xf32> to vector<2x32xf32>
    %306 = vector.extract_strided_slice %294 {offsets = [0, 64], sizes = [2, 32], strides = [1, 1]} : vector<2x96xf32> to vector<2x32xf32>
    %307 = arith.addf %306, %17 : vector<2x32xf32>
    %308 = arith.mulf %303, %307 : vector<2x32xf32>
    %309 = arith.addf %305, %308 : vector<2x32xf32>
    %310 = math.tanh %309 : vector<2x32xf32>
    %cst_53 = arith.constant 1.000000e+00 : f32
    %311 = vector.broadcast %cst_53 : f32 to vector<2x32xf32>
    %312 = arith.subf %311, %304 : vector<2x32xf32>
    %313 = arith.mulf %312, %310 : vector<2x32xf32>
    %314 = arith.mulf %304, %268 : vector<2x32xf32>
    %315 = arith.addf %313, %314 : vector<2x32xf32>
    %316 = vector.extract_strided_slice %24 {offsets = [14, 0], sizes = [2, 96], strides = [1, 1]} : vector<16x96xf32> to vector<2x96xf32>
    %cst_54 = arith.constant dense<0.000000e+00> : vector<2x96xf32>
    %317 = tpu.matmul %291, %2, %cst_54 {dimension_numbers = #tpu.dot_dimension_numbers<[1], [0], [0], [1], [0, 0, 1, 1], [], []>} : vector<2x32xf32>, vector<32x96xf32>, vector<2x96xf32> -> vector<2x96xf32>
    %318 = vector.extract_strided_slice %316 {offsets = [0, 0], sizes = [2, 64], strides = [1, 1]} : vector<2x96xf32> to vector<2x64xf32>
    %319 = vector.extract_strided_slice %317 {offsets = [0, 0], sizes = [2, 64], strides = [1, 1]} : vector<2x96xf32> to vector<2x64xf32>
    %320 = arith.addf %318, %319 : vector<2x64xf32>
    %321 = arith.negf %320 : vector<2x64xf32>
    %322 = math.exp %321 : vector<2x64xf32>
    %cst_55 = arith.constant 1.000000e+00 : f32
    %323 = vector.broadcast %cst_55 : f32 to vector<2x64xf32>
    %324 = arith.addf %323, %322 : vector<2x64xf32>
    %325 = arith.divf %323, %324 : vector<2x64xf32>
    %326 = vector.extract_strided_slice %325 {offsets = [0, 0], sizes = [2, 32], strides = [1, 1]} : vector<2x64xf32> to vector<2x32xf32>
    %327 = vector.extract_strided_slice %325 {offsets = [0, 32], sizes = [2, 32], strides = [1, 1]} : vector<2x64xf32> to vector<2x32xf32>
    %328 = vector.extract_strided_slice %316 {offsets = [0, 64], sizes = [2, 32], strides = [1, 1]} : vector<2x96xf32> to vector<2x32xf32>
    %329 = vector.extract_strided_slice %317 {offsets = [0, 64], sizes = [2, 32], strides = [1, 1]} : vector<2x96xf32> to vector<2x32xf32>
    %330 = arith.addf %329, %14 : vector<2x32xf32>
    %331 = arith.mulf %326, %330 : vector<2x32xf32>
    %332 = arith.addf %328, %331 : vector<2x32xf32>
    %333 = math.tanh %332 : vector<2x32xf32>
    %cst_56 = arith.constant 1.000000e+00 : f32
    %334 = vector.broadcast %cst_56 : f32 to vector<2x32xf32>
    %335 = arith.subf %334, %327 : vector<2x32xf32>
    %336 = arith.mulf %335, %333 : vector<2x32xf32>
    %337 = arith.mulf %327, %291 : vector<2x32xf32>
    %338 = arith.addf %336, %337 : vector<2x32xf32>
    %cst_57 = arith.constant dense<0.000000e+00> : vector<2x96xf32>
    %339 = tpu.matmul %291, %1, %cst_57 {dimension_numbers = #tpu.dot_dimension_numbers<[1], [0], [0], [1], [0, 0, 1, 1], [], []>} : vector<2x32xf32>, vector<32x96xf32>, vector<2x96xf32> -> vector<2x96xf32>
    %340 = arith.addf %339, %11 : vector<2x96xf32>
    %cst_58 = arith.constant dense<0.000000e+00> : vector<2x96xf32>
    %341 = tpu.matmul %315, %3, %cst_58 {dimension_numbers = #tpu.dot_dimension_numbers<[1], [0], [0], [1], [0, 0, 1, 1], [], []>} : vector<2x32xf32>, vector<32x96xf32>, vector<2x96xf32> -> vector<2x96xf32>
    %342 = vector.extract_strided_slice %340 {offsets = [0, 0], sizes = [2, 64], strides = [1, 1]} : vector<2x96xf32> to vector<2x64xf32>
    %343 = vector.extract_strided_slice %341 {offsets = [0, 0], sizes = [2, 64], strides = [1, 1]} : vector<2x96xf32> to vector<2x64xf32>
    %344 = arith.addf %342, %343 : vector<2x64xf32>
    %345 = arith.negf %344 : vector<2x64xf32>
    %346 = math.exp %345 : vector<2x64xf32>
    %cst_59 = arith.constant 1.000000e+00 : f32
    %347 = vector.broadcast %cst_59 : f32 to vector<2x64xf32>
    %348 = arith.addf %347, %346 : vector<2x64xf32>
    %349 = arith.divf %347, %348 : vector<2x64xf32>
    %350 = vector.extract_strided_slice %349 {offsets = [0, 0], sizes = [2, 32], strides = [1, 1]} : vector<2x64xf32> to vector<2x32xf32>
    %351 = vector.extract_strided_slice %349 {offsets = [0, 32], sizes = [2, 32], strides = [1, 1]} : vector<2x64xf32> to vector<2x32xf32>
    %352 = vector.extract_strided_slice %340 {offsets = [0, 64], sizes = [2, 32], strides = [1, 1]} : vector<2x96xf32> to vector<2x32xf32>
    %353 = vector.extract_strided_slice %341 {offsets = [0, 64], sizes = [2, 32], strides = [1, 1]} : vector<2x96xf32> to vector<2x32xf32>
    %354 = arith.addf %353, %17 : vector<2x32xf32>
    %355 = arith.mulf %350, %354 : vector<2x32xf32>
    %356 = arith.addf %352, %355 : vector<2x32xf32>
    %357 = math.tanh %356 : vector<2x32xf32>
    %cst_60 = arith.constant 1.000000e+00 : f32
    %358 = vector.broadcast %cst_60 : f32 to vector<2x32xf32>
    %359 = arith.subf %358, %351 : vector<2x32xf32>
    %360 = arith.mulf %359, %357 : vector<2x32xf32>
    %361 = arith.mulf %351, %315 : vector<2x32xf32>
    %362 = arith.addf %360, %361 : vector<2x32xf32>
    %cst_61 = arith.constant dense<0.000000e+00> : vector<2x96xf32>
    %363 = tpu.matmul %338, %1, %cst_61 {dimension_numbers = #tpu.dot_dimension_numbers<[1], [0], [0], [1], [0, 0, 1, 1], [], []>} : vector<2x32xf32>, vector<32x96xf32>, vector<2x96xf32> -> vector<2x96xf32>
    %364 = arith.addf %363, %11 : vector<2x96xf32>
    %cst_62 = arith.constant dense<0.000000e+00> : vector<2x96xf32>
    %365 = tpu.matmul %362, %3, %cst_62 {dimension_numbers = #tpu.dot_dimension_numbers<[1], [0], [0], [1], [0, 0, 1, 1], [], []>} : vector<2x32xf32>, vector<32x96xf32>, vector<2x96xf32> -> vector<2x96xf32>
    %366 = vector.extract_strided_slice %364 {offsets = [0, 0], sizes = [2, 64], strides = [1, 1]} : vector<2x96xf32> to vector<2x64xf32>
    %367 = vector.extract_strided_slice %365 {offsets = [0, 0], sizes = [2, 64], strides = [1, 1]} : vector<2x96xf32> to vector<2x64xf32>
    %368 = arith.addf %366, %367 : vector<2x64xf32>
    %369 = arith.negf %368 : vector<2x64xf32>
    %370 = math.exp %369 : vector<2x64xf32>
    %cst_63 = arith.constant 1.000000e+00 : f32
    %371 = vector.broadcast %cst_63 : f32 to vector<2x64xf32>
    %372 = arith.addf %371, %370 : vector<2x64xf32>
    %373 = arith.divf %371, %372 : vector<2x64xf32>
    %374 = vector.extract_strided_slice %373 {offsets = [0, 0], sizes = [2, 32], strides = [1, 1]} : vector<2x64xf32> to vector<2x32xf32>
    %375 = vector.extract_strided_slice %373 {offsets = [0, 32], sizes = [2, 32], strides = [1, 1]} : vector<2x64xf32> to vector<2x32xf32>
    %376 = vector.extract_strided_slice %364 {offsets = [0, 64], sizes = [2, 32], strides = [1, 1]} : vector<2x96xf32> to vector<2x32xf32>
    %377 = vector.extract_strided_slice %365 {offsets = [0, 64], sizes = [2, 32], strides = [1, 1]} : vector<2x96xf32> to vector<2x32xf32>
    %378 = arith.addf %377, %17 : vector<2x32xf32>
    %379 = arith.mulf %374, %378 : vector<2x32xf32>
    %380 = arith.addf %376, %379 : vector<2x32xf32>
    %381 = math.tanh %380 : vector<2x32xf32>
    %cst_64 = arith.constant 1.000000e+00 : f32
    %382 = vector.broadcast %cst_64 : f32 to vector<2x32xf32>
    %383 = arith.subf %382, %375 : vector<2x32xf32>
    %384 = arith.mulf %383, %381 : vector<2x32xf32>
    %385 = arith.mulf %375, %362 : vector<2x32xf32>
    %386 = arith.addf %384, %385 : vector<2x32xf32>
    %cst_65 = arith.constant dense<0.000000e+00> : vector<2x64xf32>
    %387 = tpu.matmul %386, %4, %cst_65 {dimension_numbers = #tpu.dot_dimension_numbers<[1], [0], [0], [1], [0, 0, 1, 1], [], []>} : vector<2x32xf32>, vector<32x64xf32>, vector<2x64xf32> -> vector<2x64xf32>
    %388 = vector.broadcast %18 : vector<1x64xf32> to vector<2x64xf32>
    %389 = arith.addf %387, %388 : vector<2x64xf32>
    %cst_66 = arith.constant 0.000000e+00 : f32
    %390 = vector.broadcast %cst_66 : f32 to vector<2x64xf32>
    %391 = arith.maximumf %389, %390 : vector<2x64xf32>
    %cst_67 = arith.constant dense<0.000000e+00> : vector<2x32xf32>
    %392 = tpu.matmul %391, %5, %cst_67 {dimension_numbers = #tpu.dot_dimension_numbers<[1], [0], [0], [1], [0, 0, 1, 1], [], []>} : vector<2x64xf32>, vector<64x32xf32>, vector<2x32xf32> -> vector<2x32xf32>
    %393 = vector.broadcast %19 : vector<1x32xf32> to vector<2x32xf32>
    %394 = arith.addf %392, %393 : vector<2x32xf32>
    %cst_68 = arith.constant 0.000000e+00 : f32
    %395 = vector.broadcast %cst_68 : f32 to vector<2x32xf32>
    %396 = arith.maximumf %394, %395 : vector<2x32xf32>
    %cst_69 = arith.constant dense<0.000000e+00> : vector<2x4xf32>
    %397 = tpu.matmul %396, %6, %cst_69 {dimension_numbers = #tpu.dot_dimension_numbers<[1], [0], [0], [1], [0, 0, 1, 1], [], []>} : vector<2x32xf32>, vector<32x4xf32>, vector<2x4xf32> -> vector<2x4xf32>
    %398 = vector.broadcast %20 : vector<1x4xf32> to vector<2x4xf32>
    %399 = arith.addf %397, %398 : vector<2x4xf32>
    %c0_70 = arith.constant 0 : index
    %c0_71 = arith.constant 0 : index
    %400 = vector.load %arg3[%c0_70, %c0_71] : memref<2x4xf32, #tpu.memory_space<vmem>>, vector<2x4xf32>
    tpu.vector_store %arg3[%c0_70, %c0_71], %399 {strides = array<i32>} : memref<2x4xf32, #tpu.memory_space<vmem>>, vector<2x4xf32>,
    return
  }
}

</mosaic_0001>

<llo_original>
// kernel: grunet_forward.1
$region0: #{grunet_forward.1}
  #allocation0 [shape = 'u32[]', space=smem, size = 0x4, offset = 0x4, fixed_abs, tag = 'smem constant byte address 0x4 - core index']
  #allocation1 [shape = 'u32[144,128]{1,0:T(1,128)}', space=vmem, size = 0x12000, scoped, tag = 'internal scratch']
  %s0 = inlined_call_operand.vmem [shape: f32[16,16], index: 0, kind: input, shape index: {}]
  %s1 = inlined_call_operand.vmem [shape: f32[240,128], index: 1, kind: input, shape index: {}]
  %s2 = inlined_call_operand.vmem [shape: f32[3,128], index: 2, kind: input, shape index: {}]
  %s3 = inlined_call_operand.hbm [shape: f32[2,4], index: 3, kind: output, shape index: {}]
  %s4 = sld [smem:[#allocation0]]
  $region22: #{grunet_forward.1} parent=0
    _
  %s6 = ssub.s32 1, %s4
  %s7 = scalar_select 0, %s6, %s4
  $region1: #{grunet_forward.1} parent=0
    #allocation2 [shape = 'u8[1024]{0}', space=vmem, size = 0x400, scoped, tag = 'output window, operand 0, single buffered']
    #allocation3 [shape = 's32[1]{0}', space=sflag, size = 0x4, scoped, tag = 'scoped memory for grunet_forward.1']
    %8 = vsyncpa [#allocation3], 0
    // Predicated region
    $region2: #{grunet_forward.1} parent=1 // pred_check
      _
    $region3: #{grunet_forward.1} parent=1 // pred_check_branch
      %10 = sbr.rel (0) target = $region5
    $region4: #{grunet_forward.1} parent=1 // pred_region
      _
    $region5: #{grunet_forward.1} parent=1 // pred_fallthru
      _
    // Predicated region
    $region6: #{grunet_forward.1} parent=1 // pred_check
      _
    $region7: #{grunet_forward.1} parent=1 // pred_check_branch
      %12 = sbr.rel (0) target = $region9
    $region8: #{grunet_forward.1} parent=1 // pred_region
      _
    $region9: #{grunet_forward.1} parent=1 // pred_fallthru
      _
    // Predicated region
    $region10: #{grunet_forward.1} parent=1 // pred_check
      _
    $region11: #{grunet_forward.1} parent=1 // pred_check_branch
      %14 = sbr.rel (0) target = $region13
    $region12: #{grunet_forward.1} parent=1 // pred_region
      _
    $region13: #{grunet_forward.1} parent=1 // pred_fallthru
      _
    %v15 = vld [vmem:[%s1] sm:$0xff]
    %v16 = vld [vmem:[%s1 + $0x8] sm:$0xff]
    %v17 = vld [vmem:[%s1 + $0x30] sm:$0xff]
    %v18 = vld [vmem:[%s1 + $0x38] sm:$0xff]
    %v19 = vld [vmem:[%s1 + $0x40] sm:$0xff]
    %v20 = vld [vmem:[%s1 + $0x48] sm:$0xff]
    %v21 = vld [vmem:[%s1 + $0x10] sm:$0xff]
    %v22 = vld [vmem:[%s1 + $0x18] sm:$0xff]
    %v23 = vld [vmem:[%s1 + $0x20] sm:$0xff]
    %v24 = vld [vmem:[%s1 + $0x28] sm:$0xff]
    %v25 = vld [vmem:[%s1 + $0x50] sm:$0xff]
    %v26 = vld [vmem:[%s1 + $0x58] sm:$0xff]
    %v27 = vld [vmem:[%s1 + $0x60] sm:$0xff]
    %v28 = vld [vmem:[%s1 + $0x68] sm:$0xff]
    %v29 = vld [vmem:[%s1 + $0x70] sm:$0xff]
    %v30 = vld [vmem:[%s1 + $0x78] sm:$0xff]
    %v31 = vld [vmem:[%s1 + $0x80] sm:$0xff]
    %v32 = vld [vmem:[%s1 + $0x88] sm:$0xff]
    %v33 = vld [vmem:[%s1 + $0x90] sm:$0xff]
    %v34 = vld [vmem:[%s1 + $0x98] sm:$0xff]
    %v35 = vld [vmem:[%s1 + $0xa0] sm:$0xff]
    %v36 = vld [vmem:[%s1 + $0xa8] sm:$0xff]
    %v37 = vld [vmem:[%s1 + $0xb0] sm:$0xff]
    %v38 = vld [vmem:[%s1 + $0xb8] sm:$0xff]
    %v39 = vld [vmem:[%s1 + $0xc0] sm:$0xff]
    %v40 = vld [vmem:[%s1 + $0xc8] sm:$0xff]
    %v41 = vld [vmem:[%s1 + $0xd0] sm:$0xff]
    %v42 = vld [vmem:[%s1 + $0xd8] sm:$0xff]
    %v43 = vld [vmem:[%s1 + $0xe0] sm:$0xff]
    %v44 = vld [vmem:[%s1 + $0xe8] sm:$0xff]
    %v45 = vld [vmem:[%s2] sm:$0x7]
    %v46 = vlaneseq
    %v47 = vshrl.u32 %v46, 7
    %v48 = vsub.s32 1, %v47
    %v49 = vrot.slane %v45, %v48
    %v50 = vlaneseq
    %v51 = vshrl.u32 %v50, 7
    %v52 = vsub.s32 0, %v51
    %v53 = vrot.slane %v45, %v52
    %v54 = vld [vmem:[%s0] sm:$0xff]
    %v55 = vld [vmem:[%s0 + $0x8] sm:$0xff]
    %vm56 = vcmask 130048
    %v58 = vsel %vm56, %v54, 0
    %v61 = vsel %vm56, %v55, 0
    %63 = vmatprep.subr.mxu0 0.0
    %64 = vmatpush1.msra.mxu0 %v15
    %65 = vmatprep.subr.mxu0 0.0
    %66 = vmatpush1.msra.mxu0 %v16
    %67 = vmatprep.subr.mxu0 0.0
    %68 = vmatpush1.msra.mxu0 0.0
    %69 = vmatprep.subr.mxu0 0.0
    %70 = vmatpush1.msra.mxu0 0.0
    %71 = vmatprep.subr.mxu0 0.0
    %72 = vmatpush1.msra.mxu0 0.0
    %73 = vmatprep.subr.mxu0 0.0
    %74 = vmatpush1.msra.mxu0 0.0
    %75 = vmatprep.subr.mxu0 0.0
    %76 = vmatpush1.msra.mxu0 0.0
    %77 = vmatprep.subr.mxu0 0.0
    %78 = vmatpush1.msra.mxu0 0.0
    %79 = vmatprep.subr.mxu0 0.0
    %80 = vmatpush1.msra.mxu0 0.0
    %81 = vmatprep.subr.mxu0 0.0
    %82 = vmatpush1.msra.mxu0 0.0
    %83 = vmatprep.subr.mxu0 0.0
    %84 = vmatpush1.msra.mxu0 0.0
    %85 = vmatprep.subr.mxu0 0.0
    %86 = vmatpush1.msra.mxu0 0.0
    %87 = vmatprep.subr.mxu0 0.0
    %88 = vmatpush1.msra.mxu0 0.0
    %89 = vmatprep.subr.mxu0 0.0
    %90 = vmatpush1.msra.mxu0 0.0
    %91 = vmatprep.subr.mxu0 0.0
    %92 = vmatpush1.msra.mxu0 0.0
    %93 = vmatprep.subr.mxu0 0.0
    %94 = vmatpush1.msra.mxu0 0.0
    %95 = vmatprep.subr.mxu0 0.0
    %96 = vmatpush1.msra.mxu0 0.0
    %97 = vmatprep.subr.mxu0 0.0
    %98 = vmatpush1.msra.mxu0 0.0
    %99 = vmatprep.subr.mxu0 0.0
    %100 = vmatpush1.msra.mxu0 0.0
    %101 = vmatprep.subr.mxu0 0.0
    %102 = vmatpush1.msra.mxu0 0.0
    %103 = vmatprep.subr.mxu0 0.0
    %104 = vmatpush1.msra.mxu0 0.0
    %105 = vmatprep.subr.mxu0 0.0
    %106 = vmatpush1.msra.mxu0 0.0
    %107 = vmatprep.subr.mxu0 0.0
    %108 = vmatpush1.msra.mxu0 0.0
    %109 = vmatprep.subr.mxu0 0.0
    %110 = vmatpush1.msra.mxu0 0.0
    %111 = vmatprep.subr.mxu0 0.0
    %112 = vmatpush1.msra.mxu0 0.0
    %113 = vmatprep.subr.mxu0 0.0
    %114 = vmatpush1.msra.mxu0 0.0
    %115 = vmatprep.subr.mxu0 0.0
    %116 = vmatpush1.msra.mxu0 0.0
    %117 = vmatprep.subr.mxu0 0.0
    %118 = vmatpush1.msra.mxu0 0.0
    %119 = vmatprep.subr.mxu0 0.0
    %120 = vmatpush1.msra.mxu0 0.0
    %121 = vmatprep.subr.mxu0 0.0
    %122 = vmatpush1.msra.mxu0 0.0
    %123 = vmatprep.subr.mxu0 0.0
    %124 = vmatpush1.msra.mxu0 0.0
    %125 = vmatprep.subr.mxu0 0.0
    %126 = vmatpush1.msra.mxu0 0.0
    %127 = vmatprep.mubr.f32.mxu0 0.0
    %128 = vmatmul.mubr.f32.gmra.mrb[0].mxu0 %v58
    %v129 = vpop.f32.mrb[0].mxu0
    %v130 = vadd.f32 %v53, %v129
    %v131 = vpop.f32.mrb[0].mxu0
    %132 = vmatprep.mubr.f32.mxu0 0.0
    %133 = vmatmul.mubr.f32.gmra.mrb[0].mxu0 %v61
    %v134 = vpop.f32.mrb[0].mxu0
    %v135 = vadd.f32 %v53, %v134
    %v136 = vpop.f32.mrb[0].mxu0
    %137 = vdwg.mxu0
    %v138 = vxor.u32 %v130, 2147483648
    %v139 = vmul.f32 %v138, 1.442695
    %v140 = vpow.pop %v139
    %v141 = vadd.f32 %v140, 1.0
    %v142 = vrcp.pop %v141
    %v143 = vmul.f32 1.0, %v142
    %145 = vrot.lane.b32.xlu0 %v53, 32
    %v146 = vpop.permute.xlu0 %145
    %v148 = vmul.f32 %v143, %v146
    %150 = vrot.lane.b32.xlu0 %v148, 64
    %v151 = vpop.permute.xlu0 %150
    %v153 = vadd.f32 %v130, %v151
    %v154 = vtanh.pop %v153
    %v155 = vsub.f32 1.0, %v143
    %157 = vrot.lane.b32.xlu0 %v154, 96
    %v158 = vpop.permute.xlu0 %157
    %v160 = vmul.f32 %v155, %v158
    %162 = vrot.lane.b32.xlu0 %v160, 96
    %v163 = vpop.permute.xlu0 %162
    %vm164 = vcmask 261120
    %v165 = vsel %vm164, %v163, 0
    %167 = vmatprep.subr.mxu0 0.0
    %168 = vmatpush1.msra.mxu0 %v21
    %169 = vmatprep.subr.mxu0 0.0
    %170 = vmatpush1.msra.mxu0 %v22
    %171 = vmatprep.subr.mxu0 0.0
    %172 = vmatpush1.msra.mxu0 %v23
    %173 = vmatprep.subr.mxu0 0.0
    %174 = vmatpush1.msra.mxu0 %v24
    %175 = vmatprep.subr.mxu0 0.0
    %176 = vmatpush1.msra.mxu0 0.0
    %177 = vmatprep.subr.mxu0 0.0
    %178 = vmatpush1.msra.mxu0 0.0
    %179 = vmatprep.subr.mxu0 0.0
    %180 = vmatpush1.msra.mxu0 0.0
    %181 = vmatprep.subr.mxu0 0.0
    %182 = vmatpush1.msra.mxu0 0.0
    %183 = vmatprep.subr.mxu0 0.0
    %184 = vmatpush1.msra.mxu0 0.0
    %185 = vmatprep.subr.mxu0 0.0
    %186 = vmatpush1.msra.mxu0 0.0
    %187 = vmatprep.subr.mxu0 0.0
    %188 = vmatpush1.msra.mxu0 0.0
    %189 = vmatprep.subr.mxu0 0.0
    %190 = vmatpush1.msra.mxu0 0.0
    %191 = vmatprep.subr.mxu0 0.0
    %192 = vmatpush1.msra.mxu0 0.0
    %193 = vmatprep.subr.mxu0 0.0
    %194 = vmatpush1.msra.mxu0 0.0
    %195 = vmatprep.subr.mxu0 0.0
    %196 = vmatpush1.msra.mxu0 0.0
    %197 = vmatprep.subr.mxu0 0.0
    %198 = vmatpush1.msra.mxu0 0.0
    %199 = vmatprep.subr.mxu0 0.0
    %200 = vmatpush1.msra.mxu0 0.0
    %201 = vmatprep.subr.mxu0 0.0
    %202 = vmatpush1.msra.mxu0 0.0
    %203 = vmatprep.subr.mxu0 0.0
    %204 = vmatpush1.msra.mxu0 0.0
    %205 = vmatprep.subr.mxu0 0.0
    %206 = vmatpush1.msra.mxu0 0.0
    %207 = vmatprep.subr.mxu0 0.0
    %208 = vmatpush1.msra.mxu0 0.0
    %209 = vmatprep.subr.mxu0 0.0
    %210 = vmatpush1.msra.mxu0 0.0
    %211 = vmatprep.subr.mxu0 0.0
    %212 = vmatpush1.msra.mxu0 0.0
    %213 = vmatprep.subr.mxu0 0.0
    %214 = vmatpush1.msra.mxu0 0.0
    %215 = vmatprep.subr.mxu0 0.0
    %216 = vmatpush1.msra.mxu0 0.0
    %217 = vmatprep.subr.mxu0 0.0
    %218 = vmatpush1.msra.mxu0 0.0
    %219 = vmatprep.subr.mxu0 0.0
    %220 = vmatpush1.msra.mxu0 0.0
    %221 = vmatprep.subr.mxu0 0.0
    %222 = vmatpush1.msra.mxu0 0.0
    %223 = vmatprep.subr.mxu0 0.0
    %224 = vmatpush1.msra.mxu0 0.0
    %225 = vmatprep.subr.mxu0 0.0
    %226 = vmatpush1.msra.mxu0 0.0
    %227 = vmatprep.subr.mxu0 0.0
    %228 = vmatpush1.msra.mxu0 0.0
    %229 = vmatprep.subr.mxu0 0.0
    %230 = vmatpush1.msra.mxu0 0.0
    %231 = vmatprep.mubr.f32.mxu0 0.0
    %232 = vmatmul.mubr.f32.gmra.mrb[0].mxu0 %v165
    %v233 = vpop.f32.mrb[0].mxu0
    %v234 = vadd.f32 0.0, %v233
    %v235 = vpop.f32.mrb[0].mxu0
    %236 = vdwg.mxu0
    %v238 = vrot.slane %v234, 6
    %v240 = vadd.f32 %v130, %v238
    %v241 = vxor.u32 %v240, 2147483648
    %v242 = vmul.f32 %v241, 1.442695
    %v243 = vpow.pop %v242
    %v244 = vadd.f32 %v243, 1.0
    %v245 = vrcp.pop %v244
    %v246 = vmul.f32 1.0, %v245
    %247 = vrot.lane.b32.xlu0 %v53, 96
    %v248 = vpop.permute.xlu0 %247
    %v250 = vadd.f32 %v234, %v248
    %v252 = vrot.slane %v250, 6
    %253 = vrot.lane.b32.xlu0 %v252, 64
    %v254 = vpop.permute.xlu0 %253
    %v256 = vmul.f32 %v246, %v254
    %258 = vrot.lane.b32.xlu0 %v256, 64
    %v259 = vpop.permute.xlu0 %258
    %v261 = vadd.f32 %v130, %v259
    %v262 = vtanh.pop %v261
    %v263 = vsub.f32 1.0, %v246
    %265 = vrot.lane.b32.xlu0 %v262, 96
    %v266 = vpop.permute.xlu0 %265
    %v268 = vmul.f32 %v263, %v266
    %v269 = vrot.slane %v160, 6
    %v271 = vmul.f32 %v246, %v269
    %v272 = vadd.f32 %v268, %v271
    %273 = vmatprep.subr.mxu0 0.0
    %274 = vmatpush1.msra.mxu0 %v17
    %275 = vmatprep.subr.mxu0 0.0
    %276 = vmatpush1.msra.mxu0 %v18
    %277 = vmatprep.subr.mxu0 0.0
    %278 = vmatpush1.msra.mxu0 %v19
    %279 = vmatprep.subr.mxu0 0.0
    %280 = vmatpush1.msra.mxu0 %v20
    %281 = vmatprep.subr.mxu0 0.0
    %282 = vmatpush1.msra.mxu0 0.0
    %283 = vmatprep.subr.mxu0 0.0
    %284 = vmatpush1.msra.mxu0 0.0
    %285 = vmatprep.subr.mxu0 0.0
    %286 = vmatpush1.msra.mxu0 0.0
    %287 = vmatprep.subr.mxu0 0.0
    %288 = vmatpush1.msra.mxu0 0.0
    %289 = vmatprep.subr.mxu0 0.0
    %290 = vmatpush1.msra.mxu0 0.0
    %291 = vmatprep.subr.mxu0 0.0
    %292 = vmatpush1.msra.mxu0 0.0
    %293 = vmatprep.subr.mxu0 0.0
    %294 = vmatpush1.msra.mxu0 0.0
    %295 = vmatprep.subr.mxu0 0.0
    %296 = vmatpush1.msra.mxu0 0.0
    %297 = vmatprep.subr.mxu0 0.0
    %298 = vmatpush1.msra.mxu0 0.0
    %299 = vmatprep.subr.mxu0 0.0
    %300 = vmatpush1.msra.mxu0 0.0
    %301 = vmatprep.subr.mxu0 0.0
    %302 = vmatpush1.msra.mxu0 0.0
    %303 = vmatprep.subr.mxu0 0.0
    %304 = vmatpush1.msra.mxu0 0.0
    %305 = vmatprep.subr.mxu0 0.0
    %306 = vmatpush1.msra.mxu0 0.0
    %307 = vmatprep.subr.mxu0 0.0
    %308 = vmatpush1.msra.mxu0 0.0
    %309 = vmatprep.subr.mxu0 0.0
    %310 = vmatpush1.msra.mxu0 0.0
    %311 = vmatprep.subr.mxu0 0.0
    %312 = vmatpush1.msra.mxu0 0.0
    %313 = vmatprep.subr.mxu0 0.0
    %314 = vmatpush1.msra.mxu0 0.0
    %315 = vmatprep.subr.mxu0 0.0
    %316 = vmatpush1.msra.mxu0 0.0
    %317 = vmatprep.subr.mxu0 0.0
    %318 = vmatpush1.msra.mxu0 0.0
    %319 = vmatprep.subr.mxu0 0.0
    %320 = vmatpush1.msra.mxu0 0.0
    %321 = vmatprep.subr.mxu0 0.0
    %322 = vmatpush1.msra.mxu0 0.0
    %323 = vmatprep.subr.mxu0 0.0
    %324 = vmatpush1.msra.mxu0 0.0
    %325 = vmatprep.subr.mxu0 0.0
    %326 = vmatpush1.msra.mxu0 0.0
    %327 = vmatprep.subr.mxu0 0.0
    %328 = vmatpush1.msra.mxu0 0.0
    %329 = vmatprep.subr.mxu0 0.0
    %330 = vmatpush1.msra.mxu0 0.0
    %331 = vmatprep.subr.mxu0 0.0
    %332 = vmatpush1.msra.mxu0 0.0
    %333 = vmatprep.subr.mxu0 0.0
    %334 = vmatpush1.msra.mxu0 0.0
    %335 = vmatprep.subr.mxu0 0.0
    %336 = vmatpush1.msra.mxu0 0.0
    %337 = vmatprep.mubr.f32.mxu0 0.0
    %338 = vmatmul.mubr.f32.gmra.mrb[0].mxu0 %v165
    %v339 = vpop.f32.mrb[0].mxu0
    %v340 = vadd.f32 %v49, %v339
    %v341 = vpop.f32.mrb[0].mxu0
    %342 = vdwg.mxu0
    %v343 = vxor.u32 %v340, 2147483648
    %v344 = vmul.f32 %v343, 1.442695
    %v345 = vpow.pop %v344
    %v346 = vadd.f32 %v345, 1.0
    %v347 = vrcp.pop %v346
    %v348 = vmul.f32 1.0, %v347
    %350 = vrot.lane.b32.xlu0 %v49, 32
    %v351 = vpop.permute.xlu0 %350
    %v353 = vmul.f32 %v348, %v351
    %355 = vrot.lane.b32.xlu0 %v353, 64
    %v356 = vpop.permute.xlu0 %355
    %v358 = vadd.f32 %v340, %v356
    %v359 = vtanh.pop %v358
    %v360 = vsub.f32 1.0, %v348
    %362 = vrot.lane.b32.xlu0 %v359, 96
    %v363 = vpop.permute.xlu0 %362
    %v365 = vmul.f32 %v360, %v363
    %v367 = vrot.slane %v272, 2
    %368 = vrot.lane.b32.xlu0 %v367, 96
    %v369 = vpop.permute.xlu0 %368
    %v370 = vsel %vm164, %v369, 0
    %372 = vmatprep.subr.mxu0 0.0
    %373 = vmatpush1.msra.mxu0 %v21
    %374 = vmatprep.subr.mxu0 0.0
    %375 = vmatpush1.msra.mxu0 %v22
    %376 = vmatprep.subr.mxu0 0.0
    %377 = vmatpush1.msra.mxu0 %v23
    %378 = vmatprep.subr.mxu0 0.0
    %379 = vmatpush1.msra.mxu0 %v24
    %380 = vmatprep.subr.mxu0 0.0
    %381 = vmatpush1.msra.mxu0 0.0
    %382 = vmatprep.subr.mxu0 0.0
    %383 = vmatpush1.msra.mxu0 0.0
    %384 = vmatprep.subr.mxu0 0.0
    %385 = vmatpush1.msra.mxu0 0.0
    %386 = vmatprep.subr.mxu0 0.0
    %387 = vmatpush1.msra.mxu0 0.0
    %388 = vmatprep.subr.mxu0 0.0
    %389 = vmatpush1.msra.mxu0 0.0
    %390 = vmatprep.subr.mxu0 0.0
    %391 = vmatpush1.msra.mxu0 0.0
    %392 = vmatprep.subr.mxu0 0.0
    %393 = vmatpush1.msra.mxu0 0.0
    %394 = vmatprep.subr.mxu0 0.0
    %395 = vmatpush1.msra.mxu0 0.0
    %396 = vmatprep.subr.mxu0 0.0
    %397 = vmatpush1.msra.mxu0 0.0
    %398 = vmatprep.subr.mxu0 0.0
    %399 = vmatpush1.msra.mxu0 0.0
    %400 = vmatprep.subr.mxu0 0.0
    %401 = vmatpush1.msra.mxu0 0.0
    %402 = vmatprep.subr.mxu0 0.0
    %403 = vmatpush1.msra.mxu0 0.0
    %404 = vmatprep.subr.mxu0 0.0
    %405 = vmatpush1.msra.mxu0 0.0
    %406 = vmatprep.subr.mxu0 0.0
    %407 = vmatpush1.msra.mxu0 0.0
    %408 = vmatprep.subr.mxu0 0.0
    %409 = vmatpush1.msra.mxu0 0.0
    %410 = vmatprep.subr.mxu0 0.0
    %411 = vmatpush1.msra.mxu0 0.0
    %412 = vmatprep.subr.mxu0 0.0
    %413 = vmatpush1.msra.mxu0 0.0
    %414 = vmatprep.subr.mxu0 0.0
    %415 = vmatpush1.msra.mxu0 0.0
    %416 = vmatprep.subr.mxu0 0.0
    %417 = vmatpush1.msra.mxu0 0.0
    %418 = vmatprep.subr.mxu0 0.0
    %419 = vmatpush1.msra.mxu0 0.0
    %420 = vmatprep.subr.mxu0 0.0
    %421 = vmatpush1.msra.mxu0 0.0
    %422 = vmatprep.subr.mxu0 0.0
    %423 = vmatpush1.msra.mxu0 0.0
    %424 = vmatprep.subr.mxu0 0.0
    %425 = vmatpush1.msra.mxu0 0.0
    %426 = vmatprep.subr.mxu0 0.0
    %427 = vmatpush1.msra.mxu0 0.0
    %428 = vmatprep.subr.mxu0 0.0
    %429 = vmatpush1.msra.mxu0 0.0
    %430 = vmatprep.subr.mxu0 0.0
    %431 = vmatpush1.msra.mxu0 0.0
    %432 = vmatprep.subr.mxu0 0.0
    %433 = vmatpush1.msra.mxu0 0.0
    %434 = vmatprep.subr.mxu0 0.0
    %435 = vmatpush1.msra.mxu0 0.0
    %436 = vmatprep.mubr.f32.mxu0 0.0
    %437 = vmatmul.mubr.f32.gmra.mrb[0].mxu0 %v370
    %v438 = vpop.f32.mrb[0].mxu0
    %v439 = vadd.f32 0.0, %v438
    %v440 = vpop.f32.mrb[0].mxu0
    %441 = vdwg.mxu0
    %v443 = vrot.slane %v439, 4
    %v445 = vadd.f32 %v130, %v443
    %v446 = vxor.u32 %v445, 2147483648
    %v447 = vmul.f32 %v446, 1.442695
    %v448 = vpow.pop %v447
    %v449 = vadd.f32 %v448, 1.0
    %v450 = vrcp.pop %v449
    %v451 = vmul.f32 1.0, %v450
    %v452 = vadd.f32 %v439, %v248
    %v454 = vrot.slane %v452, 4
    %455 = vrot.lane.b32.xlu0 %v454, 64
    %v456 = vpop.permute.xlu0 %455
    %v458 = vmul.f32 %v451, %v456
    %460 = vrot.lane.b32.xlu0 %v458, 64
    %v461 = vpop.permute.xlu0 %460
    %v463 = vadd.f32 %v130, %v461
    %v464 = vtanh.pop %v463
    %v465 = vsub.f32 1.0, %v451
    %467 = vrot.lane.b32.xlu0 %v464, 96
    %v468 = vpop.permute.xlu0 %467
    %v470 = vmul.f32 %v465, %v468
    %v471 = vrot.slane %v272, 6
    %v473 = vmul.f32 %v451, %v471
    %v474 = vadd.f32 %v470, %v473
    %475 = vmatprep.subr.mxu0 0.0
    %476 = vmatpush1.msra.mxu0 %v17
    %477 = vmatprep.subr.mxu0 0.0
    %478 = vmatpush1.msra.mxu0 %v18
    %479 = vmatprep.subr.mxu0 0.0
    %480 = vmatpush1.msra.mxu0 %v19
    %481 = vmatprep.subr.mxu0 0.0
    %482 = vmatpush1.msra.mxu0 %v20
    %483 = vmatprep.subr.mxu0 0.0
    %484 = vmatpush1.msra.mxu0 0.0
    %485 = vmatprep.subr.mxu0 0.0
    %486 = vmatpush1.msra.mxu0 0.0
    %487 = vmatprep.subr.mxu0 0.0
    %488 = vmatpush1.msra.mxu0 0.0
    %489 = vmatprep.subr.mxu0 0.0
    %490 = vmatpush1.msra.mxu0 0.0
    %491 = vmatprep.subr.mxu0 0.0
    %492 = vmatpush1.msra.mxu0 0.0
    %493 = vmatprep.subr.mxu0 0.0
    %494 = vmatpush1.msra.mxu0 0.0
    %495 = vmatprep.subr.mxu0 0.0
    %496 = vmatpush1.msra.mxu0 0.0
    %497 = vmatprep.subr.mxu0 0.0
    %498 = vmatpush1.msra.mxu0 0.0
    %499 = vmatprep.subr.mxu0 0.0
    %500 = vmatpush1.msra.mxu0 0.0
    %501 = vmatprep.subr.mxu0 0.0
    %502 = vmatpush1.msra.mxu0 0.0
    %503 = vmatprep.subr.mxu0 0.0
    %504 = vmatpush1.msra.mxu0 0.0
    %505 = vmatprep.subr.mxu0 0.0
    %506 = vmatpush1.msra.mxu0 0.0
    %507 = vmatprep.subr.mxu0 0.0
    %508 = vmatpush1.msra.mxu0 0.0
    %509 = vmatprep.subr.mxu0 0.0
    %510 = vmatpush1.msra.mxu0 0.0
    %511 = vmatprep.subr.mxu0 0.0
    %512 = vmatpush1.msra.mxu0 0.0
    %513 = vmatprep.subr.mxu0 0.0
    %514 = vmatpush1.msra.mxu0 0.0
    %515 = vmatprep.subr.mxu0 0.0
    %516 = vmatpush1.msra.mxu0 0.0
    %517 = vmatprep.subr.mxu0 0.0
    %518 = vmatpush1.msra.mxu0 0.0
    %519 = vmatprep.subr.mxu0 0.0
    %520 = vmatpush1.msra.mxu0 0.0
    %521 = vmatprep.subr.mxu0 0.0
    %522 = vmatpush1.msra.mxu0 0.0
    %523 = vmatprep.subr.mxu0 0.0
    %524 = vmatpush1.msra.mxu0 0.0
    %525 = vmatprep.subr.mxu0 0.0
    %526 = vmatpush1.msra.mxu0 0.0
    %527 = vmatprep.subr.mxu0 0.0
    %528 = vmatpush1.msra.mxu0 0.0
    %529 = vmatprep.subr.mxu0 0.0
    %530 = vmatpush1.msra.mxu0 0.0
    %531 = vmatprep.subr.mxu0 0.0
    %532 = vmatpush1.msra.mxu0 0.0
    %533 = vmatprep.subr.mxu0 0.0
    %534 = vmatpush1.msra.mxu0 0.0
    %535 = vmatprep.subr.mxu0 0.0
    %536 = vmatpush1.msra.mxu0 0.0
    %537 = vmatprep.subr.mxu0 0.0
    %538 = vmatpush1.msra.mxu0 0.0
    %539 = vmatprep.mubr.f32.mxu0 0.0
    %540 = vmatmul.mubr.f32.gmra.mrb[0].mxu0 %v370
    %v541 = vpop.f32.mrb[0].mxu0
    %v542 = vadd.f32 %v49, %v541
    %v543 = vpop.f32.mrb[0].mxu0
    %544 = vdwg.mxu0
    %546 = vrot.lane.b32.xlu0 %v365, 96
    %v547 = vpop.permute.xlu0 %546
    %v548 = vsel %vm164, %v547, 0
    %550 = vmatprep.subr.mxu0 0.0
    %551 = vmatpush1.msra.mxu0 %v25
    %552 = vmatprep.subr.mxu0 0.0
    %553 = vmatpush1.msra.mxu0 %v26
    %554 = vmatprep.subr.mxu0 0.0
    %555 = vmatpush1.msra.mxu0 %v27
    %556 = vmatprep.subr.mxu0 0.0
    %557 = vmatpush1.msra.mxu0 %v28
    %558 = vmatprep.subr.mxu0 0.0
    %559 = vmatpush1.msra.mxu0 0.0
    %560 = vmatprep.subr.mxu0 0.0
    %561 = vmatpush1.msra.mxu0 0.0
    %562 = vmatprep.subr.mxu0 0.0
    %563 = vmatpush1.msra.mxu0 0.0
    %564 = vmatprep.subr.mxu0 0.0
    %565 = vmatpush1.msra.mxu0 0.0
    %566 = vmatprep.subr.mxu0 0.0
    %567 = vmatpush1.msra.mxu0 0.0
    %568 = vmatprep.subr.mxu0 0.0
    %569 = vmatpush1.msra.mxu0 0.0
    %570 = vmatprep.subr.mxu0 0.0
    %571 = vmatpush1.msra.mxu0 0.0
    %572 = vmatprep.subr.mxu0 0.0
    %573 = vmatpush1.msra.mxu0 0.0
    %574 = vmatprep.subr.mxu0 0.0
    %575 = vmatpush1.msra.mxu0 0.0
    %576 = vmatprep.subr.mxu0 0.0
    %577 = vmatpush1.msra.mxu0 0.0
    %578 = vmatprep.subr.mxu0 0.0
    %579 = vmatpush1.msra.mxu0 0.0
    %580 = vmatprep.subr.mxu0 0.0
    %581 = vmatpush1.msra.mxu0 0.0
    %582 = vmatprep.subr.mxu0 0.0
    %583 = vmatpush1.msra.mxu0 0.0
    %584 = vmatprep.subr.mxu0 0.0
    %585 = vmatpush1.msra.mxu0 0.0
    %586 = vmatprep.subr.mxu0 0.0
    %587 = vmatpush1.msra.mxu0 0.0
    %588 = vmatprep.subr.mxu0 0.0
    %589 = vmatpush1.msra.mxu0 0.0
    %590 = vmatprep.subr.mxu0 0.0
    %591 = vmatpush1.msra.mxu0 0.0
    %592 = vmatprep.subr.mxu0 0.0
    %593 = vmatpush1.msra.mxu0 0.0
    %594 = vmatprep.subr.mxu0 0.0
    %595 = vmatpush1.msra.mxu0 0.0
    %596 = vmatprep.subr.mxu0 0.0
    %597 = vmatpush1.msra.mxu0 0.0
    %598 = vmatprep.subr.mxu0 0.0
    %599 = vmatpush1.msra.mxu0 0.0
    %600 = vmatprep.subr.mxu0 0.0
    %601 = vmatpush1.msra.mxu0 0.0
    %602 = vmatprep.subr.mxu0 0.0
    %603 = vmatpush1.msra.mxu0 0.0
    %604 = vmatprep.subr.mxu0 0.0
    %605 = vmatpush1.msra.mxu0 0.0
    %606 = vmatprep.subr.mxu0 0.0
    %607 = vmatpush1.msra.mxu0 0.0
    %608 = vmatprep.subr.mxu0 0.0
    %609 = vmatpush1.msra.mxu0 0.0
    %610 = vmatprep.subr.mxu0 0.0
    %611 = vmatpush1.msra.mxu0 0.0
    %612 = vmatprep.subr.mxu0 0.0
    %613 = vmatpush1.msra.mxu0 0.0
    %614 = vmatprep.mubr.f32.mxu0 0.0
    %615 = vmatmul.mubr.f32.gmra.mrb[0].mxu0 %v548
    %v616 = vpop.f32.mrb[0].mxu0
    %v617 = vadd.f32 0.0, %v616
    %v618 = vpop.f32.mrb[0].mxu0
    %619 = vdwg.mxu0
    %v620 = vadd.f32 %v542, %v617
    %v621 = vxor.u32 %v620, 2147483648
    %v622 = vmul.f32 %v621, 1.442695
    %v623 = vpow.pop %v622
    %v624 = vadd.f32 %v623, 1.0
    %v625 = vrcp.pop %v624
    %v626 = vmul.f32 1.0, %v625
    %627 = vrot.lane.b32.xlu0 %v49, 96
    %v628 = vpop.permute.xlu0 %627
    %v630 = vadd.f32 %v617, %v628
    %632 = vrot.lane.b32.xlu0 %v630, 64
    %v633 = vpop.permute.xlu0 %632
    %v635 = vmul.f32 %v626, %v633
    %637 = vrot.lane.b32.xlu0 %v635, 64
    %v638 = vpop.permute.xlu0 %637
    %v640 = vadd.f32 %v542, %v638
    %v641 = vtanh.pop %v640
    %v642 = vsub.f32 1.0, %v626
    %644 = vrot.lane.b32.xlu0 %v641, 96
    %v645 = vpop.permute.xlu0 %644
    %v647 = vmul.f32 %v642, %v645
    %v648 = vmul.f32 %v626, %v365
    %v649 = vadd.f32 %v647, %v648
    %v651 = vrot.slane %v474, 4
    %652 = vrot.lane.b32.xlu0 %v651, 96
    %v653 = vpop.permute.xlu0 %652
    %v654 = vsel %vm164, %v653, 0
    %656 = vmatprep.subr.mxu0 0.0
    %657 = vmatpush1.msra.mxu0 %v21
    %658 = vmatprep.subr.mxu0 0.0
    %659 = vmatpush1.msra.mxu0 %v22
    %660 = vmatprep.subr.mxu0 0.0
    %661 = vmatpush1.msra.mxu0 %v23
    %662 = vmatprep.subr.mxu0 0.0
    %663 = vmatpush1.msra.mxu0 %v24
    %664 = vmatprep.subr.mxu0 0.0
    %665 = vmatpush1.msra.mxu0 0.0
    %666 = vmatprep.subr.mxu0 0.0
    %667 = vmatpush1.msra.mxu0 0.0
    %668 = vmatprep.subr.mxu0 0.0
    %669 = vmatpush1.msra.mxu0 0.0
    %670 = vmatprep.subr.mxu0 0.0
    %671 = vmatpush1.msra.mxu0 0.0
    %672 = vmatprep.subr.mxu0 0.0
    %673 = vmatpush1.msra.mxu0 0.0
    %674 = vmatprep.subr.mxu0 0.0
    %675 = vmatpush1.msra.mxu0 0.0
    %676 = vmatprep.subr.mxu0 0.0
    %677 = vmatpush1.msra.mxu0 0.0
    %678 = vmatprep.subr.mxu0 0.0
    %679 = vmatpush1.msra.mxu0 0.0
    %680 = vmatprep.subr.mxu0 0.0
    %681 = vmatpush1.msra.mxu0 0.0
    %682 = vmatprep.subr.mxu0 0.0
    %683 = vmatpush1.msra.mxu0 0.0
    %684 = vmatprep.subr.mxu0 0.0
    %685 = vmatpush1.msra.mxu0 0.0
    %686 = vmatprep.subr.mxu0 0.0
    %687 = vmatpush1.msra.mxu0 0.0
    %688 = vmatprep.subr.mxu0 0.0
    %689 = vmatpush1.msra.mxu0 0.0
    %690 = vmatprep.subr.mxu0 0.0
    %691 = vmatpush1.msra.mxu0 0.0
    %692 = vmatprep.subr.mxu0 0.0
    %693 = vmatpush1.msra.mxu0 0.0
    %694 = vmatprep.subr.mxu0 0.0
    %695 = vmatpush1.msra.mxu0 0.0
    %696 = vmatprep.subr.mxu0 0.0
    %697 = vmatpush1.msra.mxu0 0.0
    %698 = vmatprep.subr.mxu0 0.0
    %699 = vmatpush1.msra.mxu0 0.0
    %700 = vmatprep.subr.mxu0 0.0
    %701 = vmatpush1.msra.mxu0 0.0
    %702 = vmatprep.subr.mxu0 0.0
    %703 = vmatpush1.msra.mxu0 0.0
    %704 = vmatprep.subr.mxu0 0.0
    %705 = vmatpush1.msra.mxu0 0.0
    %706 = vmatprep.subr.mxu0 0.0
    %707 = vmatpush1.msra.mxu0 0.0
    %708 = vmatprep.subr.mxu0 0.0
    %709 = vmatpush1.msra.mxu0 0.0
    %710 = vmatprep.subr.mxu0 0.0
    %711 = vmatpush1.msra.mxu0 0.0
    %712 = vmatprep.subr.mxu0 0.0
    %713 = vmatpush1.msra.mxu0 0.0
    %714 = vmatprep.subr.mxu0 0.0
    %715 = vmatpush1.msra.mxu0 0.0
    %716 = vmatprep.subr.mxu0 0.0
    %717 = vmatpush1.msra.mxu0 0.0
    %718 = vmatprep.subr.mxu0 0.0
    %719 = vmatpush1.msra.mxu0 0.0
    %720 = vmatprep.mubr.f32.mxu0 0.0
    %721 = vmatmul.mubr.f32.gmra.mrb[0].mxu0 %v654
    %v722 = vpop.f32.mrb[0].mxu0
    %v723 = vadd.f32 0.0, %v722
    %v724 = vpop.f32.mrb[0].mxu0
    %725 = vdwg.mxu0
    %v727 = vrot.slane %v723, 2
    %v729 = vadd.f32 %v130, %v727
    %v730 = vxor.u32 %v729, 2147483648
    %v731 = vmul.f32 %v730, 1.442695
    %v732 = vpow.pop %v731
    %v733 = vadd.f32 %v732, 1.0
    %v734 = vrcp.pop %v733
    %v735 = vmul.f32 1.0, %v734
    %v736 = vadd.f32 %v723, %v248
    %v738 = vrot.slane %v736, 2
    %739 = vrot.lane.b32.xlu0 %v738, 64
    %v740 = vpop.permute.xlu0 %739
    %v742 = vmul.f32 %v735, %v740
    %744 = vrot.lane.b32.xlu0 %v742, 64
    %v745 = vpop.permute.xlu0 %744
    %v747 = vadd.f32 %v130, %v745
    %v748 = vtanh.pop %v747
    %v749 = vsub.f32 1.0, %v735
    %751 = vrot.lane.b32.xlu0 %v748, 96
    %v752 = vpop.permute.xlu0 %751
    %v754 = vmul.f32 %v749, %v752
    %v755 = vrot.slane %v474, 6
    %v757 = vmul.f32 %v735, %v755
    %v758 = vadd.f32 %v754, %v757
    %759 = vmatprep.subr.mxu0 0.0
    %760 = vmatpush1.msra.mxu0 %v17
    %761 = vmatprep.subr.mxu0 0.0
    %762 = vmatpush1.msra.mxu0 %v18
    %763 = vmatprep.subr.mxu0 0.0
    %764 = vmatpush1.msra.mxu0 %v19
    %765 = vmatprep.subr.mxu0 0.0
    %766 = vmatpush1.msra.mxu0 %v20
    %767 = vmatprep.subr.mxu0 0.0
    %768 = vmatpush1.msra.mxu0 0.0
    %769 = vmatprep.subr.mxu0 0.0
    %770 = vmatpush1.msra.mxu0 0.0
    %771 = vmatprep.subr.mxu0 0.0
    %772 = vmatpush1.msra.mxu0 0.0
    %773 = vmatprep.subr.mxu0 0.0
    %774 = vmatpush1.msra.mxu0 0.0
    %775 = vmatprep.subr.mxu0 0.0
    %776 = vmatpush1.msra.mxu0 0.0
    %777 = vmatprep.subr.mxu0 0.0
    %778 = vmatpush1.msra.mxu0 0.0
    %779 = vmatprep.subr.mxu0 0.0
    %780 = vmatpush1.msra.mxu0 0.0
    %781 = vmatprep.subr.mxu0 0.0
    %782 = vmatpush1.msra.mxu0 0.0
    %783 = vmatprep.subr.mxu0 0.0
    %784 = vmatpush1.msra.mxu0 0.0
    %785 = vmatprep.subr.mxu0 0.0
    %786 = vmatpush1.msra.mxu0 0.0
    %787 = vmatprep.subr.mxu0 0.0
    %788 = vmatpush1.msra.mxu0 0.0
    %789 = vmatprep.subr.mxu0 0.0
    %790 = vmatpush1.msra.mxu0 0.0
    %791 = vmatprep.subr.mxu0 0.0
    %792 = vmatpush1.msra.mxu0 0.0
    %793 = vmatprep.subr.mxu0 0.0
    %794 = vmatpush1.msra.mxu0 0.0
    %795 = vmatprep.subr.mxu0 0.0
    %796 = vmatpush1.msra.mxu0 0.0
    %797 = vmatprep.subr.mxu0 0.0
    %798 = vmatpush1.msra.mxu0 0.0
    %799 = vmatprep.subr.mxu0 0.0
    %800 = vmatpush1.msra.mxu0 0.0
    %801 = vmatprep.subr.mxu0 0.0
    %802 = vmatpush1.msra.mxu0 0.0
    %803 = vmatprep.subr.mxu0 0.0
    %804 = vmatpush1.msra.mxu0 0.0
    %805 = vmatprep.subr.mxu0 0.0
    %806 = vmatpush1.msra.mxu0 0.0
    %807 = vmatprep.subr.mxu0 0.0
    %808 = vmatpush1.msra.mxu0 0.0
    %809 = vmatprep.subr.mxu0 0.0
    %810 = vmatpush1.msra.mxu0 0.0
    %811 = vmatprep.subr.mxu0 0.0
    %812 = vmatpush1.msra.mxu0 0.0
    %813 = vmatprep.subr.mxu0 0.0
    %814 = vmatpush1.msra.mxu0 0.0
    %815 = vmatprep.subr.mxu0 0.0
    %816 = vmatpush1.msra.mxu0 0.0
    %817 = vmatprep.subr.mxu0 0.0
    %818 = vmatpush1.msra.mxu0 0.0
    %819 = vmatprep.subr.mxu0 0.0
    %820 = vmatpush1.msra.mxu0 0.0
    %821 = vmatprep.subr.mxu0 0.0
    %822 = vmatpush1.msra.mxu0 0.0
    %823 = vmatprep.mubr.f32.mxu0 0.0
    %824 = vmatmul.mubr.f32.gmra.mrb[0].mxu0 %v654
    %v825 = vpop.f32.mrb[0].mxu0
    %v826 = vadd.f32 %v49, %v825
    %v827 = vpop.f32.mrb[0].mxu0
    %828 = vdwg.mxu0
    %830 = vrot.lane.b32.xlu0 %v649, 96
    %v831 = vpop.permute.xlu0 %830
    %v832 = vsel %vm164, %v831, 0
    %834 = vmatprep.subr.mxu0 0.0
    %835 = vmatpush1.msra.mxu0 %v25
    %836 = vmatprep.subr.mxu0 0.0
    %837 = vmatpush1.msra.mxu0 %v26
    %838 = vmatprep.subr.mxu0 0.0
    %839 = vmatpush1.msra.mxu0 %v27
    %840 = vmatprep.subr.mxu0 0.0
    %841 = vmatpush1.msra.mxu0 %v28
    %842 = vmatprep.subr.mxu0 0.0
    %843 = vmatpush1.msra.mxu0 0.0
    %844 = vmatprep.subr.mxu0 0.0
    %845 = vmatpush1.msra.mxu0 0.0
    %846 = vmatprep.subr.mxu0 0.0
    %847 = vmatpush1.msra.mxu0 0.0
    %848 = vmatprep.subr.mxu0 0.0
    %849 = vmatpush1.msra.mxu0 0.0
    %850 = vmatprep.subr.mxu0 0.0
    %851 = vmatpush1.msra.mxu0 0.0
    %852 = vmatprep.subr.mxu0 0.0
    %853 = vmatpush1.msra.mxu0 0.0
    %854 = vmatprep.subr.mxu0 0.0
    %855 = vmatpush1.msra.mxu0 0.0
    %856 = vmatprep.subr.mxu0 0.0
    %857 = vmatpush1.msra.mxu0 0.0
    %858 = vmatprep.subr.mxu0 0.0
    %859 = vmatpush1.msra.mxu0 0.0
    %860 = vmatprep.subr.mxu0 0.0
    %861 = vmatpush1.msra.mxu0 0.0
    %862 = vmatprep.subr.mxu0 0.0
    %863 = vmatpush1.msra.mxu0 0.0
    %864 = vmatprep.subr.mxu0 0.0
    %865 = vmatpush1.msra.mxu0 0.0
    %866 = vmatprep.subr.mxu0 0.0
    %867 = vmatpush1.msra.mxu0 0.0
    %868 = vmatprep.subr.mxu0 0.0
    %869 = vmatpush1.msra.mxu0 0.0
    %870 = vmatprep.subr.mxu0 0.0
    %871 = vmatpush1.msra.mxu0 0.0
    %872 = vmatprep.subr.mxu0 0.0
    %873 = vmatpush1.msra.mxu0 0.0
    %874 = vmatprep.subr.mxu0 0.0
    %875 = vmatpush1.msra.mxu0 0.0
    %876 = vmatprep.subr.mxu0 0.0
    %877 = vmatpush1.msra.mxu0 0.0
    %878 = vmatprep.subr.mxu0 0.0
    %879 = vmatpush1.msra.mxu0 0.0
    %880 = vmatprep.subr.mxu0 0.0
    %881 = vmatpush1.msra.mxu0 0.0
    %882 = vmatprep.subr.mxu0 0.0
    %883 = vmatpush1.msra.mxu0 0.0
    %884 = vmatprep.subr.mxu0 0.0
    %885 = vmatpush1.msra.mxu0 0.0
    %886 = vmatprep.subr.mxu0 0.0
    %887 = vmatpush1.msra.mxu0 0.0
    %888 = vmatprep.subr.mxu0 0.0
    %889 = vmatpush1.msra.mxu0 0.0
    %890 = vmatprep.subr.mxu0 0.0
    %891 = vmatpush1.msra.mxu0 0.0
    %892 = vmatprep.subr.mxu0 0.0
    %893 = vmatpush1.msra.mxu0 0.0
    %894 = vmatprep.subr.mxu0 0.0
    %895 = vmatpush1.msra.mxu0 0.0
    %896 = vmatprep.subr.mxu0 0.0
    %897 = vmatpush1.msra.mxu0 0.0
    %898 = vmatprep.mubr.f32.mxu0 0.0
    %899 = vmatmul.mubr.f32.gmra.mrb[0].mxu0 %v832
    %v900 = vpop.f32.mrb[0].mxu0
    %v901 = vadd.f32 0.0, %v900
    %v902 = vpop.f32.mrb[0].mxu0
    %903 = vdwg.mxu0
    %v904 = vadd.f32 %v826, %v901
    %v905 = vxor.u32 %v904, 2147483648
    %v906 = vmul.f32 %v905, 1.442695
    %v907 = vpow.pop %v906
    %v908 = vadd.f32 %v907, 1.0
    %v909 = vrcp.pop %v908
    %v910 = vmul.f32 1.0, %v909
    %v911 = vadd.f32 %v901, %v628
    %913 = vrot.lane.b32.xlu0 %v911, 64
    %v914 = vpop.permute.xlu0 %913
    %v916 = vmul.f32 %v910, %v914
    %918 = vrot.lane.b32.xlu0 %v916, 64
    %v919 = vpop.permute.xlu0 %918
    %v921 = vadd.f32 %v826, %v919
    %v922 = vtanh.pop %v921
    %v923 = vsub.f32 1.0, %v910
    %925 = vrot.lane.b32.xlu0 %v922, 96
    %v926 = vpop.permute.xlu0 %925
    %v928 = vmul.f32 %v923, %v926
    %v929 = vmul.f32 %v910, %v649
    %v930 = vadd.f32 %v928, %v929
    %v932 = vrot.slane %v758, 6
    %933 = vrot.lane.b32.xlu0 %v932, 96
    %v934 = vpop.permute.xlu0 %933
    %v935 = vsel %vm164, %v934, 0
    %937 = vmatprep.subr.mxu0 0.0
    %938 = vmatpush1.msra.mxu0 %v21
    %939 = vmatprep.subr.mxu0 0.0
    %940 = vmatpush1.msra.mxu0 %v22
    %941 = vmatprep.subr.mxu0 0.0
    %942 = vmatpush1.msra.mxu0 %v23
    %943 = vmatprep.subr.mxu0 0.0
    %944 = vmatpush1.msra.mxu0 %v24
    %945 = vmatprep.subr.mxu0 0.0
    %946 = vmatpush1.msra.mxu0 0.0
    %947 = vmatprep.subr.mxu0 0.0
    %948 = vmatpush1.msra.mxu0 0.0
    %949 = vmatprep.subr.mxu0 0.0
    %950 = vmatpush1.msra.mxu0 0.0
    %951 = vmatprep.subr.mxu0 0.0
    %952 = vmatpush1.msra.mxu0 0.0
    %953 = vmatprep.subr.mxu0 0.0
    %954 = vmatpush1.msra.mxu0 0.0
    %955 = vmatprep.subr.mxu0 0.0
    %956 = vmatpush1.msra.mxu0 0.0
    %957 = vmatprep.subr.mxu0 0.0
    %958 = vmatpush1.msra.mxu0 0.0
    %959 = vmatprep.subr.mxu0 0.0
    %960 = vmatpush1.msra.mxu0 0.0
    %961 = vmatprep.subr.mxu0 0.0
    %962 = vmatpush1.msra.mxu0 0.0
    %963 = vmatprep.subr.mxu0 0.0
    %964 = vmatpush1.msra.mxu0 0.0
    %965 = vmatprep.subr.mxu0 0.0
    %966 = vmatpush1.msra.mxu0 0.0
    %967 = vmatprep.subr.mxu0 0.0
    %968 = vmatpush1.msra.mxu0 0.0
    %969 = vmatprep.subr.mxu0 0.0
    %970 = vmatpush1.msra.mxu0 0.0
    %971 = vmatprep.subr.mxu0 0.0
    %972 = vmatpush1.msra.mxu0 0.0
    %973 = vmatprep.subr.mxu0 0.0
    %974 = vmatpush1.msra.mxu0 0.0
    %975 = vmatprep.subr.mxu0 0.0
    %976 = vmatpush1.msra.mxu0 0.0
    %977 = vmatprep.subr.mxu0 0.0
    %978 = vmatpush1.msra.mxu0 0.0
    %979 = vmatprep.subr.mxu0 0.0
    %980 = vmatpush1.msra.mxu0 0.0
    %981 = vmatprep.subr.mxu0 0.0
    %982 = vmatpush1.msra.mxu0 0.0
    %983 = vmatprep.subr.mxu0 0.0
    %984 = vmatpush1.msra.mxu0 0.0
    %985 = vmatprep.subr.mxu0 0.0
    %986 = vmatpush1.msra.mxu0 0.0
    %987 = vmatprep.subr.mxu0 0.0
    %988 = vmatpush1.msra.mxu0 0.0
    %989 = vmatprep.subr.mxu0 0.0
    %990 = vmatpush1.msra.mxu0 0.0
    %991 = vmatprep.subr.mxu0 0.0
    %992 = vmatpush1.msra.mxu0 0.0
    %993 = vmatprep.subr.mxu0 0.0
    %994 = vmatpush1.msra.mxu0 0.0
    %995 = vmatprep.subr.mxu0 0.0
    %996 = vmatpush1.msra.mxu0 0.0
    %997 = vmatprep.subr.mxu0 0.0
    %998 = vmatpush1.msra.mxu0 0.0
    %999 = vmatprep.subr.mxu0 0.0
    %1000 = vmatpush1.msra.mxu0 0.0
    %1001 = vmatprep.mubr.f32.mxu0 0.0
    %1002 = vmatmul.mubr.f32.gmra.mrb[0].mxu0 %v935
    %v1003 = vpop.f32.mrb[0].mxu0
    %v1004 = vadd.f32 0.0, %v1003
    %v1005 = vpop.f32.mrb[0].mxu0
    %1006 = vdwg.mxu0
    %v1007 = vadd.f32 %v135, %v1004
    %v1008 = vxor.u32 %v1007, 2147483648
    %v1009 = vmul.f32 %v1008, 1.442695
    %v1010 = vpow.pop %v1009
    %v1011 = vadd.f32 %v1010, 1.0
    %v1012 = vrcp.pop %v1011
    %v1013 = vmul.f32 1.0, %v1012
    %v1014 = vadd.f32 %v1004, %v248
    %1016 = vrot.lane.b32.xlu0 %v1014, 64
    %v1017 = vpop.permute.xlu0 %1016
    %v1019 = vmul.f32 %v1013, %v1017
    %1021 = vrot.lane.b32.xlu0 %v1019, 64
    %v1022 = vpop.permute.xlu0 %1021
    %v1024 = vadd.f32 %v135, %v1022
    %v1025 = vtanh.pop %v1024
    %v1026 = vsub.f32 1.0, %v1013
    %1028 = vrot.lane.b32.xlu0 %v1025, 96
    %v1029 = vpop.permute.xlu0 %1028
    %v1031 = vmul.f32 %v1026, %v1029
    %v1033 = vmul.f32 %v1013, %v932
    %v1034 = vadd.f32 %v1031, %v1033
    %1035 = vmatprep.subr.mxu0 0.0
    %1036 = vmatpush1.msra.mxu0 %v17
    %1037 = vmatprep.subr.mxu0 0.0
    %1038 = vmatpush1.msra.mxu0 %v18
    %1039 = vmatprep.subr.mxu0 0.0
    %1040 = vmatpush1.msra.mxu0 %v19
    %1041 = vmatprep.subr.mxu0 0.0
    %1042 = vmatpush1.msra.mxu0 %v20
    %1043 = vmatprep.subr.mxu0 0.0
    %1044 = vmatpush1.msra.mxu0 0.0
    %1045 = vmatprep.subr.mxu0 0.0
    %1046 = vmatpush1.msra.mxu0 0.0
    %1047 = vmatprep.subr.mxu0 0.0
    %1048 = vmatpush1.msra.mxu0 0.0
    %1049 = vmatprep.subr.mxu0 0.0
    %1050 = vmatpush1.msra.mxu0 0.0
    %1051 = vmatprep.subr.mxu0 0.0
    %1052 = vmatpush1.msra.mxu0 0.0
    %1053 = vmatprep.subr.mxu0 0.0
    %1054 = vmatpush1.msra.mxu0 0.0
    %1055 = vmatprep.subr.mxu0 0.0
    %1056 = vmatpush1.msra.mxu0 0.0
    %1057 = vmatprep.subr.mxu0 0.0
    %1058 = vmatpush1.msra.mxu0 0.0
    %1059 = vmatprep.subr.mxu0 0.0
    %1060 = vmatpush1.msra.mxu0 0.0
    %1061 = vmatprep.subr.mxu0 0.0
    %1062 = vmatpush1.msra.mxu0 0.0
    %1063 = vmatprep.subr.mxu0 0.0
    %1064 = vmatpush1.msra.mxu0 0.0
    %1065 = vmatprep.subr.mxu0 0.0
    %1066 = vmatpush1.msra.mxu0 0.0
    %1067 = vmatprep.subr.mxu0 0.0
    %1068 = vmatpush1.msra.mxu0 0.0
    %1069 = vmatprep.subr.mxu0 0.0
    %1070 = vmatpush1.msra.mxu0 0.0
    %1071 = vmatprep.subr.mxu0 0.0
    %1072 = vmatpush1.msra.mxu0 0.0
    %1073 = vmatprep.subr.mxu0 0.0
    %1074 = vmatpush1.msra.mxu0 0.0
    %1075 = vmatprep.subr.mxu0 0.0
    %1076 = vmatpush1.msra.mxu0 0.0
    %1077 = vmatprep.subr.mxu0 0.0
    %1078 = vmatpush1.msra.mxu0 0.0
    %1079 = vmatprep.subr.mxu0 0.0
    %1080 = vmatpush1.msra.mxu0 0.0
    %1081 = vmatprep.subr.mxu0 0.0
    %1082 = vmatpush1.msra.mxu0 0.0
    %1083 = vmatprep.subr.mxu0 0.0
    %1084 = vmatpush1.msra.mxu0 0.0
    %1085 = vmatprep.subr.mxu0 0.0
    %1086 = vmatpush1.msra.mxu0 0.0
    %1087 = vmatprep.subr.mxu0 0.0
    %1088 = vmatpush1.msra.mxu0 0.0
    %1089 = vmatprep.subr.mxu0 0.0
    %1090 = vmatpush1.msra.mxu0 0.0
    %1091 = vmatprep.subr.mxu0 0.0
    %1092 = vmatpush1.msra.mxu0 0.0
    %1093 = vmatprep.subr.mxu0 0.0
    %1094 = vmatpush1.msra.mxu0 0.0
    %1095 = vmatprep.subr.mxu0 0.0
    %1096 = vmatpush1.msra.mxu0 0.0
    %1097 = vmatprep.subr.mxu0 0.0
    %1098 = vmatpush1.msra.mxu0 0.0
    %1099 = vmatprep.mubr.f32.mxu0 0.0
    %1100 = vmatmul.mubr.f32.gmra.mrb[0].mxu0 %v935
    %v1101 = vpop.f32.mrb[0].mxu0
    %v1102 = vadd.f32 %v49, %v1101
    %v1103 = vpop.f32.mrb[0].mxu0
    %1104 = vdwg.mxu0
    %1106 = vrot.lane.b32.xlu0 %v930, 96
    %v1107 = vpop.permute.xlu0 %1106
    %v1108 = vsel %vm164, %v1107, 0
    %1110 = vmatprep.subr.mxu0 0.0
    %1111 = vmatpush1.msra.mxu0 %v25
    %1112 = vmatprep.subr.mxu0 0.0
    %1113 = vmatpush1.msra.mxu0 %v26
    %1114 = vmatprep.subr.mxu0 0.0
    %1115 = vmatpush1.msra.mxu0 %v27
    %1116 = vmatprep.subr.mxu0 0.0
    %1117 = vmatpush1.msra.mxu0 %v28
    %1118 = vmatprep.subr.mxu0 0.0
    %1119 = vmatpush1.msra.mxu0 0.0
    %1120 = vmatprep.subr.mxu0 0.0
    %1121 = vmatpush1.msra.mxu0 0.0
    %1122 = vmatprep.subr.mxu0 0.0
    %1123 = vmatpush1.msra.mxu0 0.0
    %1124 = vmatprep.subr.mxu0 0.0
    %1125 = vmatpush1.msra.mxu0 0.0
    %1126 = vmatprep.subr.mxu0 0.0
    %1127 = vmatpush1.msra.mxu0 0.0
    %1128 = vmatprep.subr.mxu0 0.0
    %1129 = vmatpush1.msra.mxu0 0.0
    %1130 = vmatprep.subr.mxu0 0.0
    %1131 = vmatpush1.msra.mxu0 0.0
    %1132 = vmatprep.subr.mxu0 0.0
    %1133 = vmatpush1.msra.mxu0 0.0
    %1134 = vmatprep.subr.mxu0 0.0
    %1135 = vmatpush1.msra.mxu0 0.0
    %1136 = vmatprep.subr.mxu0 0.0
    %1137 = vmatpush1.msra.mxu0 0.0
    %1138 = vmatprep.subr.mxu0 0.0
    %1139 = vmatpush1.msra.mxu0 0.0
    %1140 = vmatprep.subr.mxu0 0.0
    %1141 = vmatpush1.msra.mxu0 0.0
    %1142 = vmatprep.subr.mxu0 0.0
    %1143 = vmatpush1.msra.mxu0 0.0
    %1144 = vmatprep.subr.mxu0 0.0
    %1145 = vmatpush1.msra.mxu0 0.0
    %1146 = vmatprep.subr.mxu0 0.0
    %1147 = vmatpush1.msra.mxu0 0.0
    %1148 = vmatprep.subr.mxu0 0.0
    %1149 = vmatpush1.msra.mxu0 0.0
    %1150 = vmatprep.subr.mxu0 0.0
    %1151 = vmatpush1.msra.mxu0 0.0
    %1152 = vmatprep.subr.mxu0 0.0
    %1153 = vmatpush1.msra.mxu0 0.0
    %1154 = vmatprep.subr.mxu0 0.0
    %1155 = vmatpush1.msra.mxu0 0.0
    %1156 = vmatprep.subr.mxu0 0.0
    %1157 = vmatpush1.msra.mxu0 0.0
    %1158 = vmatprep.subr.mxu0 0.0
    %1159 = vmatpush1.msra.mxu0 0.0
    %1160 = vmatprep.subr.mxu0 0.0
    %1161 = vmatpush1.msra.mxu0 0.0
    %1162 = vmatprep.subr.mxu0 0.0
    %1163 = vmatpush1.msra.mxu0 0.0
    %1164 = vmatprep.subr.mxu0 0.0
    %1165 = vmatpush1.msra.mxu0 0.0
    %1166 = vmatprep.subr.mxu0 0.0
    %1167 = vmatpush1.msra.mxu0 0.0
    %1168 = vmatprep.subr.mxu0 0.0
    %1169 = vmatpush1.msra.mxu0 0.0
    %1170 = vmatprep.subr.mxu0 0.0
    %1171 = vmatpush1.msra.mxu0 0.0
    %1172 = vmatprep.subr.mxu0 0.0
    %1173 = vmatpush1.msra.mxu0 0.0
    %1174 = vmatprep.mubr.f32.mxu0 0.0
    %1175 = vmatmul.mubr.f32.gmra.mrb[0].mxu0 %v1108
    %v1176 = vpop.f32.mrb[0].mxu0
    %v1177 = vadd.f32 0.0, %v1176
    %v1178 = vpop.f32.mrb[0].mxu0
    %1179 = vdwg.mxu0
    %v1180 = vadd.f32 %v1102, %v1177
    %v1181 = vxor.u32 %v1180, 2147483648
    %v1182 = vmul.f32 %v1181, 1.442695
    %v1183 = vpow.pop %v1182
    %v1184 = vadd.f32 %v1183, 1.0
    %v1185 = vrcp.pop %v1184
    %v1186 = vmul.f32 1.0, %v1185
    %v1187 = vadd.f32 %v1177, %v628
    %1189 = vrot.lane.b32.xlu0 %v1187, 64
    %v1190 = vpop.permute.xlu0 %1189
    %v1192 = vmul.f32 %v1186, %v1190
    %1194 = vrot.lane.b32.xlu0 %v1192, 64
    %v1195 = vpop.permute.xlu0 %1194
    %v1197 = vadd.f32 %v1102, %v1195
    %v1198 = vtanh.pop %v1197
    %v1199 = vsub.f32 1.0, %v1186
    %1201 = vrot.lane.b32.xlu0 %v1198, 96
    %v1202 = vpop.permute.xlu0 %1201
    %v1204 = vmul.f32 %v1199, %v1202
    %v1205 = vmul.f32 %v1186, %v930
    %v1206 = vadd.f32 %v1204, %v1205
    %1208 = vrot.lane.b32.xlu0 %v1034, 96
    %v1209 = vpop.permute.xlu0 %1208
    %v1210 = vsel %vm164, %v1209, 0
    %1212 = vmatprep.subr.mxu0 0.0
    %1213 = vmatpush1.msra.mxu0 %v21
    %1214 = vmatprep.subr.mxu0 0.0
    %1215 = vmatpush1.msra.mxu0 %v22
    %1216 = vmatprep.subr.mxu0 0.0
    %1217 = vmatpush1.msra.mxu0 %v23
    %1218 = vmatprep.subr.mxu0 0.0
    %1219 = vmatpush1.msra.mxu0 %v24
    %1220 = vmatprep.subr.mxu0 0.0
    %1221 = vmatpush1.msra.mxu0 0.0
    %1222 = vmatprep.subr.mxu0 0.0
    %1223 = vmatpush1.msra.mxu0 0.0
    %1224 = vmatprep.subr.mxu0 0.0
    %1225 = vmatpush1.msra.mxu0 0.0
    %1226 = vmatprep.subr.mxu0 0.0
    %1227 = vmatpush1.msra.mxu0 0.0
    %1228 = vmatprep.subr.mxu0 0.0
    %1229 = vmatpush1.msra.mxu0 0.0
    %1230 = vmatprep.subr.mxu0 0.0
    %1231 = vmatpush1.msra.mxu0 0.0
    %1232 = vmatprep.subr.mxu0 0.0
    %1233 = vmatpush1.msra.mxu0 0.0
    %1234 = vmatprep.subr.mxu0 0.0
    %1235 = vmatpush1.msra.mxu0 0.0
    %1236 = vmatprep.subr.mxu0 0.0
    %1237 = vmatpush1.msra.mxu0 0.0
    %1238 = vmatprep.subr.mxu0 0.0
    %1239 = vmatpush1.msra.mxu0 0.0
    %1240 = vmatprep.subr.mxu0 0.0
    %1241 = vmatpush1.msra.mxu0 0.0
    %1242 = vmatprep.subr.mxu0 0.0
    %1243 = vmatpush1.msra.mxu0 0.0
    %1244 = vmatprep.subr.mxu0 0.0
    %1245 = vmatpush1.msra.mxu0 0.0
    %1246 = vmatprep.subr.mxu0 0.0
    %1247 = vmatpush1.msra.mxu0 0.0
    %1248 = vmatprep.subr.mxu0 0.0
    %1249 = vmatpush1.msra.mxu0 0.0
    %1250 = vmatprep.subr.mxu0 0.0
    %1251 = vmatpush1.msra.mxu0 0.0
    %1252 = vmatprep.subr.mxu0 0.0
    %1253 = vmatpush1.msra.mxu0 0.0
    %1254 = vmatprep.subr.mxu0 0.0
    %1255 = vmatpush1.msra.mxu0 0.0
    %1256 = vmatprep.subr.mxu0 0.0
    %1257 = vmatpush1.msra.mxu0 0.0
    %1258 = vmatprep.subr.mxu0 0.0
    %1259 = vmatpush1.msra.mxu0 0.0
    %1260 = vmatprep.subr.mxu0 0.0
    %1261 = vmatpush1.msra.mxu0 0.0
    %1262 = vmatprep.subr.mxu0 0.0
    %1263 = vmatpush1.msra.mxu0 0.0
    %1264 = vmatprep.subr.mxu0 0.0
    %1265 = vmatpush1.msra.mxu0 0.0
    %1266 = vmatprep.subr.mxu0 0.0
    %1267 = vmatpush1.msra.mxu0 0.0
    %1268 = vmatprep.subr.mxu0 0.0
    %1269 = vmatpush1.msra.mxu0 0.0
    %1270 = vmatprep.subr.mxu0 0.0
    %1271 = vmatpush1.msra.mxu0 0.0
    %1272 = vmatprep.subr.mxu0 0.0
    %1273 = vmatpush1.msra.mxu0 0.0
    %1274 = vmatprep.subr.mxu0 0.0
    %1275 = vmatpush1.msra.mxu0 0.0
    %1276 = vmatprep.mubr.f32.mxu0 0.0
    %1277 = vmatmul.mubr.f32.gmra.mrb[0].mxu0 %v1210
    %v1278 = vpop.f32.mrb[0].mxu0
    %v1279 = vadd.f32 0.0, %v1278
    %v1280 = vpop.f32.mrb[0].mxu0
    %1281 = vdwg.mxu0
    %v1283 = vrot.slane %v1279, 6
    %v1285 = vadd.f32 %v135, %v1283
    %v1286 = vxor.u32 %v1285, 2147483648
    %v1287 = vmul.f32 %v1286, 1.442695
    %v1288 = vpow.pop %v1287
    %v1289 = vadd.f32 %v1288, 1.0
    %v1290 = vrcp.pop %v1289
    %v1291 = vmul.f32 1.0, %v1290
    %v1292 = vadd.f32 %v1279, %v248
    %v1294 = vrot.slane %v1292, 6
    %1295 = vrot.lane.b32.xlu0 %v1294, 64
    %v1296 = vpop.permute.xlu0 %1295
    %v1298 = vmul.f32 %v1291, %v1296
    %1300 = vrot.lane.b32.xlu0 %v1298, 64
    %v1301 = vpop.permute.xlu0 %1300
    %v1303 = vadd.f32 %v135, %v1301
    %v1304 = vtanh.pop %v1303
    %v1305 = vsub.f32 1.0, %v1291
    %1307 = vrot.lane.b32.xlu0 %v1304, 96
    %v1308 = vpop.permute.xlu0 %1307
    %v1310 = vmul.f32 %v1305, %v1308
    %v1311 = vrot.slane %v1034, 6
    %v1313 = vmul.f32 %v1291, %v1311
    %v1314 = vadd.f32 %v1310, %v1313
    %1315 = vmatprep.subr.mxu0 0.0
    %1316 = vmatpush1.msra.mxu0 %v17
    %1317 = vmatprep.subr.mxu0 0.0
    %1318 = vmatpush1.msra.mxu0 %v18
    %1319 = vmatprep.subr.mxu0 0.0
    %1320 = vmatpush1.msra.mxu0 %v19
    %1321 = vmatprep.subr.mxu0 0.0
    %1322 = vmatpush1.msra.mxu0 %v20
    %1323 = vmatprep.subr.mxu0 0.0
    %1324 = vmatpush1.msra.mxu0 0.0
    %1325 = vmatprep.subr.mxu0 0.0
    %1326 = vmatpush1.msra.mxu0 0.0
    %1327 = vmatprep.subr.mxu0 0.0
    %1328 = vmatpush1.msra.mxu0 0.0
    %1329 = vmatprep.subr.mxu0 0.0
    %1330 = vmatpush1.msra.mxu0 0.0
    %1331 = vmatprep.subr.mxu0 0.0
    %1332 = vmatpush1.msra.mxu0 0.0
    %1333 = vmatprep.subr.mxu0 0.0
    %1334 = vmatpush1.msra.mxu0 0.0
    %1335 = vmatprep.subr.mxu0 0.0
    %1336 = vmatpush1.msra.mxu0 0.0
    %1337 = vmatprep.subr.mxu0 0.0
    %1338 = vmatpush1.msra.mxu0 0.0
    %1339 = vmatprep.subr.mxu0 0.0
    %1340 = vmatpush1.msra.mxu0 0.0
    %1341 = vmatprep.subr.mxu0 0.0
    %1342 = vmatpush1.msra.mxu0 0.0
    %1343 = vmatprep.subr.mxu0 0.0
    %1344 = vmatpush1.msra.mxu0 0.0
    %1345 = vmatprep.subr.mxu0 0.0
    %1346 = vmatpush1.msra.mxu0 0.0
    %1347 = vmatprep.subr.mxu0 0.0
    %1348 = vmatpush1.msra.mxu0 0.0
    %1349 = vmatprep.subr.mxu0 0.0
    %1350 = vmatpush1.msra.mxu0 0.0
    %1351 = vmatprep.subr.mxu0 0.0
    %1352 = vmatpush1.msra.mxu0 0.0
    %1353 = vmatprep.subr.mxu0 0.0
    %1354 = vmatpush1.msra.mxu0 0.0
    %1355 = vmatprep.subr.mxu0 0.0
    %1356 = vmatpush1.msra.mxu0 0.0
    %1357 = vmatprep.subr.mxu0 0.0
    %1358 = vmatpush1.msra.mxu0 0.0
    %1359 = vmatprep.subr.mxu0 0.0
    %1360 = vmatpush1.msra.mxu0 0.0
    %1361 = vmatprep.subr.mxu0 0.0
    %1362 = vmatpush1.msra.mxu0 0.0
    %1363 = vmatprep.subr.mxu0 0.0
    %1364 = vmatpush1.msra.mxu0 0.0
    %1365 = vmatprep.subr.mxu0 0.0
    %1366 = vmatpush1.msra.mxu0 0.0
    %1367 = vmatprep.subr.mxu0 0.0
    %1368 = vmatpush1.msra.mxu0 0.0
    %1369 = vmatprep.subr.mxu0 0.0
    %1370 = vmatpush1.msra.mxu0 0.0
    %1371 = vmatprep.subr.mxu0 0.0
    %1372 = vmatpush1.msra.mxu0 0.0
    %1373 = vmatprep.subr.mxu0 0.0
    %1374 = vmatpush1.msra.mxu0 0.0
    %1375 = vmatprep.subr.mxu0 0.0
    %1376 = vmatpush1.msra.mxu0 0.0
    %1377 = vmatprep.subr.mxu0 0.0
    %1378 = vmatpush1.msra.mxu0 0.0
    %1379 = vmatprep.mubr.f32.mxu0 0.0
    %1380 = vmatmul.mubr.f32.gmra.mrb[0].mxu0 %v1210
    %v1381 = vpop.f32.mrb[0].mxu0
    %v1382 = vadd.f32 %v49, %v1381
    %v1383 = vpop.f32.mrb[0].mxu0
    %1384 = vdwg.mxu0
    %1386 = vrot.lane.b32.xlu0 %v1206, 96
    %v1387 = vpop.permute.xlu0 %1386
    %v1388 = vsel %vm164, %v1387, 0
    %1390 = vmatprep.subr.mxu0 0.0
    %1391 = vmatpush1.msra.mxu0 %v25
    %1392 = vmatprep.subr.mxu0 0.0
    %1393 = vmatpush1.msra.mxu0 %v26
    %1394 = vmatprep.subr.mxu0 0.0
    %1395 = vmatpush1.msra.mxu0 %v27
    %1396 = vmatprep.subr.mxu0 0.0
    %1397 = vmatpush1.msra.mxu0 %v28
    %1398 = vmatprep.subr.mxu0 0.0
    %1399 = vmatpush1.msra.mxu0 0.0
    %1400 = vmatprep.subr.mxu0 0.0
    %1401 = vmatpush1.msra.mxu0 0.0
    %1402 = vmatprep.subr.mxu0 0.0
    %1403 = vmatpush1.msra.mxu0 0.0
    %1404 = vmatprep.subr.mxu0 0.0
    %1405 = vmatpush1.msra.mxu0 0.0
    %1406 = vmatprep.subr.mxu0 0.0
    %1407 = vmatpush1.msra.mxu0 0.0
    %1408 = vmatprep.subr.mxu0 0.0
    %1409 = vmatpush1.msra.mxu0 0.0
    %1410 = vmatprep.subr.mxu0 0.0
    %1411 = vmatpush1.msra.mxu0 0.0
    %1412 = vmatprep.subr.mxu0 0.0
    %1413 = vmatpush1.msra.mxu0 0.0
    %1414 = vmatprep.subr.mxu0 0.0
    %1415 = vmatpush1.msra.mxu0 0.0
    %1416 = vmatprep.subr.mxu0 0.0
    %1417 = vmatpush1.msra.mxu0 0.0
    %1418 = vmatprep.subr.mxu0 0.0
    %1419 = vmatpush1.msra.mxu0 0.0
    %1420 = vmatprep.subr.mxu0 0.0
    %1421 = vmatpush1.msra.mxu0 0.0
    %1422 = vmatprep.subr.mxu0 0.0
    %1423 = vmatpush1.msra.mxu0 0.0
    %1424 = vmatprep.subr.mxu0 0.0
    %1425 = vmatpush1.msra.mxu0 0.0
    %1426 = vmatprep.subr.mxu0 0.0
    %1427 = vmatpush1.msra.mxu0 0.0
    %1428 = vmatprep.subr.mxu0 0.0
    %1429 = vmatpush1.msra.mxu0 0.0
    %1430 = vmatprep.subr.mxu0 0.0
    %1431 = vmatpush1.msra.mxu0 0.0
    %1432 = vmatprep.subr.mxu0 0.0
    %1433 = vmatpush1.msra.mxu0 0.0
    %1434 = vmatprep.subr.mxu0 0.0
    %1435 = vmatpush1.msra.mxu0 0.0
    %1436 = vmatprep.subr.mxu0 0.0
    %1437 = vmatpush1.msra.mxu0 0.0
    %1438 = vmatprep.subr.mxu0 0.0
    %1439 = vmatpush1.msra.mxu0 0.0
    %1440 = vmatprep.subr.mxu0 0.0
    %1441 = vmatpush1.msra.mxu0 0.0
    %1442 = vmatprep.subr.mxu0 0.0
    %1443 = vmatpush1.msra.mxu0 0.0
    %1444 = vmatprep.subr.mxu0 0.0
    %1445 = vmatpush1.msra.mxu0 0.0
    %1446 = vmatprep.subr.mxu0 0.0
    %1447 = vmatpush1.msra.mxu0 0.0
    %1448 = vmatprep.subr.mxu0 0.0
    %1449 = vmatpush1.msra.mxu0 0.0
    %1450 = vmatprep.subr.mxu0 0.0
    %1451 = vmatpush1.msra.mxu0 0.0
    %1452 = vmatprep.subr.mxu0 0.0
    %1453 = vmatpush1.msra.mxu0 0.0
    %1454 = vmatprep.mubr.f32.mxu0 0.0
    %1455 = vmatmul.mubr.f32.gmra.mrb[0].mxu0 %v1388
    %v1456 = vpop.f32.mrb[0].mxu0
    %v1457 = vadd.f32 0.0, %v1456
    %v1458 = vpop.f32.mrb[0].mxu0
    %1459 = vdwg.mxu0
    %v1460 = vadd.f32 %v1382, %v1457
    %v1461 = vxor.u32 %v1460, 2147483648
    %v1462 = vmul.f32 %v1461, 1.442695
    %v1463 = vpow.pop %v1462
    %v1464 = vadd.f32 %v1463, 1.0
    %v1465 = vrcp.pop %v1464
    %v1466 = vmul.f32 1.0, %v1465
    %v1467 = vadd.f32 %v1457, %v628
    %1469 = vrot.lane.b32.xlu0 %v1467, 64
    %v1470 = vpop.permute.xlu0 %1469
    %v1472 = vmul.f32 %v1466, %v1470
    %1474 = vrot.lane.b32.xlu0 %v1472, 64
    %v1475 = vpop.permute.xlu0 %1474
    %v1477 = vadd.f32 %v1382, %v1475
    %v1478 = vtanh.pop %v1477
    %v1479 = vsub.f32 1.0, %v1466
    %1481 = vrot.lane.b32.xlu0 %v1478, 96
    %v1482 = vpop.permute.xlu0 %1481
    %v1484 = vmul.f32 %v1479, %v1482
    %v1485 = vmul.f32 %v1466, %v1206
    %v1486 = vadd.f32 %v1484, %v1485
    %v1488 = vrot.slane %v1314, 2
    %1489 = vrot.lane.b32.xlu0 %v1488, 96
    %v1490 = vpop.permute.xlu0 %1489
    %v1491 = vsel %vm164, %v1490, 0
    %1493 = vmatprep.subr.mxu0 0.0
    %1494 = vmatpush1.msra.mxu0 %v21
    %1495 = vmatprep.subr.mxu0 0.0
    %1496 = vmatpush1.msra.mxu0 %v22
    %1497 = vmatprep.subr.mxu0 0.0
    %1498 = vmatpush1.msra.mxu0 %v23
    %1499 = vmatprep.subr.mxu0 0.0
    %1500 = vmatpush1.msra.mxu0 %v24
    %1501 = vmatprep.subr.mxu0 0.0
    %1502 = vmatpush1.msra.mxu0 0.0
    %1503 = vmatprep.subr.mxu0 0.0
    %1504 = vmatpush1.msra.mxu0 0.0
    %1505 = vmatprep.subr.mxu0 0.0
    %1506 = vmatpush1.msra.mxu0 0.0
    %1507 = vmatprep.subr.mxu0 0.0
    %1508 = vmatpush1.msra.mxu0 0.0
    %1509 = vmatprep.subr.mxu0 0.0
    %1510 = vmatpush1.msra.mxu0 0.0
    %1511 = vmatprep.subr.mxu0 0.0
    %1512 = vmatpush1.msra.mxu0 0.0
    %1513 = vmatprep.subr.mxu0 0.0
    %1514 = vmatpush1.msra.mxu0 0.0
    %1515 = vmatprep.subr.mxu0 0.0
    %1516 = vmatpush1.msra.mxu0 0.0
    %1517 = vmatprep.subr.mxu0 0.0
    %1518 = vmatpush1.msra.mxu0 0.0
    %1519 = vmatprep.subr.mxu0 0.0
    %1520 = vmatpush1.msra.mxu0 0.0
    %1521 = vmatprep.subr.mxu0 0.0
    %1522 = vmatpush1.msra.mxu0 0.0
    %1523 = vmatprep.subr.mxu0 0.0
    %1524 = vmatpush1.msra.mxu0 0.0
    %1525 = vmatprep.subr.mxu0 0.0
    %1526 = vmatpush1.msra.mxu0 0.0
    %1527 = vmatprep.subr.mxu0 0.0
    %1528 = vmatpush1.msra.mxu0 0.0
    %1529 = vmatprep.subr.mxu0 0.0
    %1530 = vmatpush1.msra.mxu0 0.0
    %1531 = vmatprep.subr.mxu0 0.0
    %1532 = vmatpush1.msra.mxu0 0.0
    %1533 = vmatprep.subr.mxu0 0.0
    %1534 = vmatpush1.msra.mxu0 0.0
    %1535 = vmatprep.subr.mxu0 0.0
    %1536 = vmatpush1.msra.mxu0 0.0
    %1537 = vmatprep.subr.mxu0 0.0
    %1538 = vmatpush1.msra.mxu0 0.0
    %1539 = vmatprep.subr.mxu0 0.0
    %1540 = vmatpush1.msra.mxu0 0.0
    %1541 = vmatprep.subr.mxu0 0.0
    %1542 = vmatpush1.msra.mxu0 0.0
    %1543 = vmatprep.subr.mxu0 0.0
    %1544 = vmatpush1.msra.mxu0 0.0
    %1545 = vmatprep.subr.mxu0 0.0
    %1546 = vmatpush1.msra.mxu0 0.0
    %1547 = vmatprep.subr.mxu0 0.0
    %1548 = vmatpush1.msra.mxu0 0.0
    %1549 = vmatprep.subr.mxu0 0.0
    %1550 = vmatpush1.msra.mxu0 0.0
    %1551 = vmatprep.subr.mxu0 0.0
    %1552 = vmatpush1.msra.mxu0 0.0
    %1553 = vmatprep.subr.mxu0 0.0
    %1554 = vmatpush1.msra.mxu0 0.0
    %1555 = vmatprep.subr.mxu0 0.0
    %1556 = vmatpush1.msra.mxu0 0.0
    %1557 = vmatprep.mubr.f32.mxu0 0.0
    %1558 = vmatmul.mubr.f32.gmra.mrb[0].mxu0 %v1491
    %v1559 = vpop.f32.mrb[0].mxu0
    %v1560 = vadd.f32 0.0, %v1559
    %v1561 = vpop.f32.mrb[0].mxu0
    %1562 = vdwg.mxu0
    %v1564 = vrot.slane %v1560, 4
    %v1566 = vadd.f32 %v135, %v1564
    %v1567 = vxor.u32 %v1566, 2147483648
    %v1568 = vmul.f32 %v1567, 1.442695
    %v1569 = vpow.pop %v1568
    %v1570 = vadd.f32 %v1569, 1.0
    %v1571 = vrcp.pop %v1570
    %v1572 = vmul.f32 1.0, %v1571
    %v1573 = vadd.f32 %v1560, %v248
    %v1575 = vrot.slane %v1573, 4
    %1576 = vrot.lane.b32.xlu0 %v1575, 64
    %v1577 = vpop.permute.xlu0 %1576
    %v1579 = vmul.f32 %v1572, %v1577
    %1581 = vrot.lane.b32.xlu0 %v1579, 64
    %v1582 = vpop.permute.xlu0 %1581
    %v1584 = vadd.f32 %v135, %v1582
    %v1585 = vtanh.pop %v1584
    %v1586 = vsub.f32 1.0, %v1572
    %1588 = vrot.lane.b32.xlu0 %v1585, 96
    %v1589 = vpop.permute.xlu0 %1588
    %v1591 = vmul.f32 %v1586, %v1589
    %v1592 = vrot.slane %v1314, 6
    %v1594 = vmul.f32 %v1572, %v1592
    %v1595 = vadd.f32 %v1591, %v1594
    %1596 = vmatprep.subr.mxu0 0.0
    %1597 = vmatpush1.msra.mxu0 %v17
    %1598 = vmatprep.subr.mxu0 0.0
    %1599 = vmatpush1.msra.mxu0 %v18
    %1600 = vmatprep.subr.mxu0 0.0
    %1601 = vmatpush1.msra.mxu0 %v19
    %1602 = vmatprep.subr.mxu0 0.0
    %1603 = vmatpush1.msra.mxu0 %v20
    %1604 = vmatprep.subr.mxu0 0.0
    %1605 = vmatpush1.msra.mxu0 0.0
    %1606 = vmatprep.subr.mxu0 0.0
    %1607 = vmatpush1.msra.mxu0 0.0
    %1608 = vmatprep.subr.mxu0 0.0
    %1609 = vmatpush1.msra.mxu0 0.0
    %1610 = vmatprep.subr.mxu0 0.0
    %1611 = vmatpush1.msra.mxu0 0.0
    %1612 = vmatprep.subr.mxu0 0.0
    %1613 = vmatpush1.msra.mxu0 0.0
    %1614 = vmatprep.subr.mxu0 0.0
    %1615 = vmatpush1.msra.mxu0 0.0
    %1616 = vmatprep.subr.mxu0 0.0
    %1617 = vmatpush1.msra.mxu0 0.0
    %1618 = vmatprep.subr.mxu0 0.0
    %1619 = vmatpush1.msra.mxu0 0.0
    %1620 = vmatprep.subr.mxu0 0.0
    %1621 = vmatpush1.msra.mxu0 0.0
    %1622 = vmatprep.subr.mxu0 0.0
    %1623 = vmatpush1.msra.mxu0 0.0
    %1624 = vmatprep.subr.mxu0 0.0
    %1625 = vmatpush1.msra.mxu0 0.0
    %1626 = vmatprep.subr.mxu0 0.0
    %1627 = vmatpush1.msra.mxu0 0.0
    %1628 = vmatprep.subr.mxu0 0.0
    %1629 = vmatpush1.msra.mxu0 0.0
    %1630 = vmatprep.subr.mxu0 0.0
    %1631 = vmatpush1.msra.mxu0 0.0
    %1632 = vmatprep.subr.mxu0 0.0
    %1633 = vmatpush1.msra.mxu0 0.0
    %1634 = vmatprep.subr.mxu0 0.0
    %1635 = vmatpush1.msra.mxu0 0.0
    %1636 = vmatprep.subr.mxu0 0.0
    %1637 = vmatpush1.msra.mxu0 0.0
    %1638 = vmatprep.subr.mxu0 0.0
    %1639 = vmatpush1.msra.mxu0 0.0
    %1640 = vmatprep.subr.mxu0 0.0
    %1641 = vmatpush1.msra.mxu0 0.0
    %1642 = vmatprep.subr.mxu0 0.0
    %1643 = vmatpush1.msra.mxu0 0.0
    %1644 = vmatprep.subr.mxu0 0.0
    %1645 = vmatpush1.msra.mxu0 0.0
    %1646 = vmatprep.subr.mxu0 0.0
    %1647 = vmatpush1.msra.mxu0 0.0
    %1648 = vmatprep.subr.mxu0 0.0
    %1649 = vmatpush1.msra.mxu0 0.0
    %1650 = vmatprep.subr.mxu0 0.0
    %1651 = vmatpush1.msra.mxu0 0.0
    %1652 = vmatprep.subr.mxu0 0.0
    %1653 = vmatpush1.msra.mxu0 0.0
    %1654 = vmatprep.subr.mxu0 0.0
    %1655 = vmatpush1.msra.mxu0 0.0
    %1656 = vmatprep.subr.mxu0 0.0
    %1657 = vmatpush1.msra.mxu0 0.0
    %1658 = vmatprep.subr.mxu0 0.0
    %1659 = vmatpush1.msra.mxu0 0.0
    %1660 = vmatprep.mubr.f32.mxu0 0.0
    %1661 = vmatmul.mubr.f32.gmra.mrb[0].mxu0 %v1491
    %v1662 = vpop.f32.mrb[0].mxu0
    %v1663 = vadd.f32 %v49, %v1662
    %v1664 = vpop.f32.mrb[0].mxu0
    %1665 = vdwg.mxu0
    %1667 = vrot.lane.b32.xlu0 %v1486, 96
    %v1668 = vpop.permute.xlu0 %1667
    %v1669 = vsel %vm164, %v1668, 0
    %1671 = vmatprep.subr.mxu0 0.0
    %1672 = vmatpush1.msra.mxu0 %v25
    %1673 = vmatprep.subr.mxu0 0.0
    %1674 = vmatpush1.msra.mxu0 %v26
    %1675 = vmatprep.subr.mxu0 0.0
    %1676 = vmatpush1.msra.mxu0 %v27
    %1677 = vmatprep.subr.mxu0 0.0
    %1678 = vmatpush1.msra.mxu0 %v28
    %1679 = vmatprep.subr.mxu0 0.0
    %1680 = vmatpush1.msra.mxu0 0.0
    %1681 = vmatprep.subr.mxu0 0.0
    %1682 = vmatpush1.msra.mxu0 0.0
    %1683 = vmatprep.subr.mxu0 0.0
    %1684 = vmatpush1.msra.mxu0 0.0
    %1685 = vmatprep.subr.mxu0 0.0
    %1686 = vmatpush1.msra.mxu0 0.0
    %1687 = vmatprep.subr.mxu0 0.0
    %1688 = vmatpush1.msra.mxu0 0.0
    %1689 = vmatprep.subr.mxu0 0.0
    %1690 = vmatpush1.msra.mxu0 0.0
    %1691 = vmatprep.subr.mxu0 0.0
    %1692 = vmatpush1.msra.mxu0 0.0
    %1693 = vmatprep.subr.mxu0 0.0
    %1694 = vmatpush1.msra.mxu0 0.0
    %1695 = vmatprep.subr.mxu0 0.0
    %1696 = vmatpush1.msra.mxu0 0.0
    %1697 = vmatprep.subr.mxu0 0.0
    %1698 = vmatpush1.msra.mxu0 0.0
    %1699 = vmatprep.subr.mxu0 0.0
    %1700 = vmatpush1.msra.mxu0 0.0
    %1701 = vmatprep.subr.mxu0 0.0
    %1702 = vmatpush1.msra.mxu0 0.0
    %1703 = vmatprep.subr.mxu0 0.0
    %1704 = vmatpush1.msra.mxu0 0.0
    %1705 = vmatprep.subr.mxu0 0.0
    %1706 = vmatpush1.msra.mxu0 0.0
    %1707 = vmatprep.subr.mxu0 0.0
    %1708 = vmatpush1.msra.mxu0 0.0
    %1709 = vmatprep.subr.mxu0 0.0
    %1710 = vmatpush1.msra.mxu0 0.0
    %1711 = vmatprep.subr.mxu0 0.0
    %1712 = vmatpush1.msra.mxu0 0.0
    %1713 = vmatprep.subr.mxu0 0.0
    %1714 = vmatpush1.msra.mxu0 0.0
    %1715 = vmatprep.subr.mxu0 0.0
    %1716 = vmatpush1.msra.mxu0 0.0
    %1717 = vmatprep.subr.mxu0 0.0
    %1718 = vmatpush1.msra.mxu0 0.0
    %1719 = vmatprep.subr.mxu0 0.0
    %1720 = vmatpush1.msra.mxu0 0.0
    %1721 = vmatprep.subr.mxu0 0.0
    %1722 = vmatpush1.msra.mxu0 0.0
    %1723 = vmatprep.subr.mxu0 0.0
    %1724 = vmatpush1.msra.mxu0 0.0
    %1725 = vmatprep.subr.mxu0 0.0
    %1726 = vmatpush1.msra.mxu0 0.0
    %1727 = vmatprep.subr.mxu0 0.0
    %1728 = vmatpush1.msra.mxu0 0.0
    %1729 = vmatprep.subr.mxu0 0.0
    %1730 = vmatpush1.msra.mxu0 0.0
    %1731 = vmatprep.subr.mxu0 0.0
    %1732 = vmatpush1.msra.mxu0 0.0
    %1733 = vmatprep.subr.mxu0 0.0
    %1734 = vmatpush1.msra.mxu0 0.0
    %1735 = vmatprep.mubr.f32.mxu0 0.0
    %1736 = vmatmul.mubr.f32.gmra.mrb[0].mxu0 %v1669
    %v1737 = vpop.f32.mrb[0].mxu0
    %v1738 = vadd.f32 0.0, %v1737
    %v1739 = vpop.f32.mrb[0].mxu0
    %1740 = vdwg.mxu0
    %v1741 = vadd.f32 %v1663, %v1738
    %v1742 = vxor.u32 %v1741, 2147483648
    %v1743 = vmul.f32 %v1742, 1.442695
    %v1744 = vpow.pop %v1743
    %v1745 = vadd.f32 %v1744, 1.0
    %v1746 = vrcp.pop %v1745
    %v1747 = vmul.f32 1.0, %v1746
    %v1748 = vadd.f32 %v1738, %v628
    %1750 = vrot.lane.b32.xlu0 %v1748, 64
    %v1751 = vpop.permute.xlu0 %1750
    %v1753 = vmul.f32 %v1747, %v1751
    %1755 = vrot.lane.b32.xlu0 %v1753, 64
    %v1756 = vpop.permute.xlu0 %1755
    %v1758 = vadd.f32 %v1663, %v1756
    %v1759 = vtanh.pop %v1758
    %v1760 = vsub.f32 1.0, %v1747
    %1762 = vrot.lane.b32.xlu0 %v1759, 96
    %v1763 = vpop.permute.xlu0 %1762
    %v1765 = vmul.f32 %v1760, %v1763
    %v1766 = vmul.f32 %v1747, %v1486
    %v1767 = vadd.f32 %v1765, %v1766
    %v1769 = vrot.slane %v1595, 4
    %1770 = vrot.lane.b32.xlu0 %v1769, 96
    %v1771 = vpop.permute.xlu0 %1770
    %v1772 = vsel %vm164, %v1771, 0
    %1774 = vmatprep.subr.mxu0 0.0
    %1775 = vmatpush1.msra.mxu0 %v21
    %1776 = vmatprep.subr.mxu0 0.0
    %1777 = vmatpush1.msra.mxu0 %v22
    %1778 = vmatprep.subr.mxu0 0.0
    %1779 = vmatpush1.msra.mxu0 %v23
    %1780 = vmatprep.subr.mxu0 0.0
    %1781 = vmatpush1.msra.mxu0 %v24
    %1782 = vmatprep.subr.mxu0 0.0
    %1783 = vmatpush1.msra.mxu0 0.0
    %1784 = vmatprep.subr.mxu0 0.0
    %1785 = vmatpush1.msra.mxu0 0.0
    %1786 = vmatprep.subr.mxu0 0.0
    %1787 = vmatpush1.msra.mxu0 0.0
    %1788 = vmatprep.subr.mxu0 0.0
    %1789 = vmatpush1.msra.mxu0 0.0
    %1790 = vmatprep.subr.mxu0 0.0
    %1791 = vmatpush1.msra.mxu0 0.0
    %1792 = vmatprep.subr.mxu0 0.0
    %1793 = vmatpush1.msra.mxu0 0.0
    %1794 = vmatprep.subr.mxu0 0.0
    %1795 = vmatpush1.msra.mxu0 0.0
    %1796 = vmatprep.subr.mxu0 0.0
    %1797 = vmatpush1.msra.mxu0 0.0
    %1798 = vmatprep.subr.mxu0 0.0
    %1799 = vmatpush1.msra.mxu0 0.0
    %1800 = vmatprep.subr.mxu0 0.0
    %1801 = vmatpush1.msra.mxu0 0.0
    %1802 = vmatprep.subr.mxu0 0.0
    %1803 = vmatpush1.msra.mxu0 0.0
    %1804 = vmatprep.subr.mxu0 0.0
    %1805 = vmatpush1.msra.mxu0 0.0
    %1806 = vmatprep.subr.mxu0 0.0
    %1807 = vmatpush1.msra.mxu0 0.0
    %1808 = vmatprep.subr.mxu0 0.0
    %1809 = vmatpush1.msra.mxu0 0.0
    %1810 = vmatprep.subr.mxu0 0.0
    %1811 = vmatpush1.msra.mxu0 0.0
    %1812 = vmatprep.subr.mxu0 0.0
    %1813 = vmatpush1.msra.mxu0 0.0
    %1814 = vmatprep.subr.mxu0 0.0
    %1815 = vmatpush1.msra.mxu0 0.0
    %1816 = vmatprep.subr.mxu0 0.0
    %1817 = vmatpush1.msra.mxu0 0.0
    %1818 = vmatprep.subr.mxu0 0.0
    %1819 = vmatpush1.msra.mxu0 0.0
    %1820 = vmatprep.subr.mxu0 0.0
    %1821 = vmatpush1.msra.mxu0 0.0
    %1822 = vmatprep.subr.mxu0 0.0
    %1823 = vmatpush1.msra.mxu0 0.0
    %1824 = vmatprep.subr.mxu0 0.0
    %1825 = vmatpush1.msra.mxu0 0.0
    %1826 = vmatprep.subr.mxu0 0.0
    %1827 = vmatpush1.msra.mxu0 0.0
    %1828 = vmatprep.subr.mxu0 0.0
    %1829 = vmatpush1.msra.mxu0 0.0
    %1830 = vmatprep.subr.mxu0 0.0
    %1831 = vmatpush1.msra.mxu0 0.0
    %1832 = vmatprep.subr.mxu0 0.0
    %1833 = vmatpush1.msra.mxu0 0.0
    %1834 = vmatprep.subr.mxu0 0.0
    %1835 = vmatpush1.msra.mxu0 0.0
    %1836 = vmatprep.subr.mxu0 0.0
    %1837 = vmatpush1.msra.mxu0 0.0
    %1838 = vmatprep.mubr.f32.mxu0 0.0
    %1839 = vmatmul.mubr.f32.gmra.mrb[0].mxu0 %v1772
    %v1840 = vpop.f32.mrb[0].mxu0
    %v1841 = vadd.f32 0.0, %v1840
    %v1842 = vpop.f32.mrb[0].mxu0
    %1843 = vdwg.mxu0
    %v1845 = vrot.slane %v1841, 2
    %v1847 = vadd.f32 %v135, %v1845
    %v1848 = vxor.u32 %v1847, 2147483648
    %v1849 = vmul.f32 %v1848, 1.442695
    %v1850 = vpow.pop %v1849
    %v1851 = vadd.f32 %v1850, 1.0
    %v1852 = vrcp.pop %v1851
    %v1853 = vmul.f32 1.0, %v1852
    %v1854 = vadd.f32 %v1841, %v248
    %v1856 = vrot.slane %v1854, 2
    %1857 = vrot.lane.b32.xlu0 %v1856, 64
    %v1858 = vpop.permute.xlu0 %1857
    %v1860 = vmul.f32 %v1853, %v1858
    %1862 = vrot.lane.b32.xlu0 %v1860, 64
    %v1863 = vpop.permute.xlu0 %1862
    %v1865 = vadd.f32 %v135, %v1863
    %v1866 = vtanh.pop %v1865
    %v1867 = vsub.f32 1.0, %v1853
    %1869 = vrot.lane.b32.xlu0 %v1866, 96
    %v1870 = vpop.permute.xlu0 %1869
    %v1872 = vmul.f32 %v1867, %v1870
    %v1873 = vrot.slane %v1595, 6
    %v1875 = vmul.f32 %v1853, %v1873
    %v1876 = vadd.f32 %v1872, %v1875
    %1877 = vmatprep.subr.mxu0 0.0
    %1878 = vmatpush1.msra.mxu0 %v17
    %1879 = vmatprep.subr.mxu0 0.0
    %1880 = vmatpush1.msra.mxu0 %v18
    %1881 = vmatprep.subr.mxu0 0.0
    %1882 = vmatpush1.msra.mxu0 %v19
    %1883 = vmatprep.subr.mxu0 0.0
    %1884 = vmatpush1.msra.mxu0 %v20
    %1885 = vmatprep.subr.mxu0 0.0
    %1886 = vmatpush1.msra.mxu0 0.0
    %1887 = vmatprep.subr.mxu0 0.0
    %1888 = vmatpush1.msra.mxu0 0.0
    %1889 = vmatprep.subr.mxu0 0.0
    %1890 = vmatpush1.msra.mxu0 0.0
    %1891 = vmatprep.subr.mxu0 0.0
    %1892 = vmatpush1.msra.mxu0 0.0
    %1893 = vmatprep.subr.mxu0 0.0
    %1894 = vmatpush1.msra.mxu0 0.0
    %1895 = vmatprep.subr.mxu0 0.0
    %1896 = vmatpush1.msra.mxu0 0.0
    %1897 = vmatprep.subr.mxu0 0.0
    %1898 = vmatpush1.msra.mxu0 0.0
    %1899 = vmatprep.subr.mxu0 0.0
    %1900 = vmatpush1.msra.mxu0 0.0
    %1901 = vmatprep.subr.mxu0 0.0
    %1902 = vmatpush1.msra.mxu0 0.0
    %1903 = vmatprep.subr.mxu0 0.0
    %1904 = vmatpush1.msra.mxu0 0.0
    %1905 = vmatprep.subr.mxu0 0.0
    %1906 = vmatpush1.msra.mxu0 0.0
    %1907 = vmatprep.subr.mxu0 0.0
    %1908 = vmatpush1.msra.mxu0 0.0
    %1909 = vmatprep.subr.mxu0 0.0
    %1910 = vmatpush1.msra.mxu0 0.0
    %1911 = vmatprep.subr.mxu0 0.0
    %1912 = vmatpush1.msra.mxu0 0.0
    %1913 = vmatprep.subr.mxu0 0.0
    %1914 = vmatpush1.msra.mxu0 0.0
    %1915 = vmatprep.subr.mxu0 0.0
    %1916 = vmatpush1.msra.mxu0 0.0
    %1917 = vmatprep.subr.mxu0 0.0
    %1918 = vmatpush1.msra.mxu0 0.0
    %1919 = vmatprep.subr.mxu0 0.0
    %1920 = vmatpush1.msra.mxu0 0.0
    %1921 = vmatprep.subr.mxu0 0.0
    %1922 = vmatpush1.msra.mxu0 0.0
    %1923 = vmatprep.subr.mxu0 0.0
    %1924 = vmatpush1.msra.mxu0 0.0
    %1925 = vmatprep.subr.mxu0 0.0
    %1926 = vmatpush1.msra.mxu0 0.0
    %1927 = vmatprep.subr.mxu0 0.0
    %1928 = vmatpush1.msra.mxu0 0.0
    %1929 = vmatprep.subr.mxu0 0.0
    %1930 = vmatpush1.msra.mxu0 0.0
    %1931 = vmatprep.subr.mxu0 0.0
    %1932 = vmatpush1.msra.mxu0 0.0
    %1933 = vmatprep.subr.mxu0 0.0
    %1934 = vmatpush1.msra.mxu0 0.0
    %1935 = vmatprep.subr.mxu0 0.0
    %1936 = vmatpush1.msra.mxu0 0.0
    %1937 = vmatprep.subr.mxu0 0.0
    %1938 = vmatpush1.msra.mxu0 0.0
    %1939 = vmatprep.subr.mxu0 0.0
    %1940 = vmatpush1.msra.mxu0 0.0
    %1941 = vmatprep.mubr.f32.mxu0 0.0
    %1942 = vmatmul.mubr.f32.gmra.mrb[0].mxu0 %v1772
    %v1943 = vpop.f32.mrb[0].mxu0
    %v1944 = vadd.f32 %v49, %v1943
    %v1945 = vpop.f32.mrb[0].mxu0
    %1946 = vdwg.mxu0
    %1948 = vrot.lane.b32.xlu0 %v1767, 96
    %v1949 = vpop.permute.xlu0 %1948
    %v1950 = vsel %vm164, %v1949, 0
    %1952 = vmatprep.subr.mxu0 0.0
    %1953 = vmatpush1.msra.mxu0 %v25
    %1954 = vmatprep.subr.mxu0 0.0
    %1955 = vmatpush1.msra.mxu0 %v26
    %1956 = vmatprep.subr.mxu0 0.0
    %1957 = vmatpush1.msra.mxu0 %v27
    %1958 = vmatprep.subr.mxu0 0.0
    %1959 = vmatpush1.msra.mxu0 %v28
    %1960 = vmatprep.subr.mxu0 0.0
    %1961 = vmatpush1.msra.mxu0 0.0
    %1962 = vmatprep.subr.mxu0 0.0
    %1963 = vmatpush1.msra.mxu0 0.0
    %1964 = vmatprep.subr.mxu0 0.0
    %1965 = vmatpush1.msra.mxu0 0.0
    %1966 = vmatprep.subr.mxu0 0.0
    %1967 = vmatpush1.msra.mxu0 0.0
    %1968 = vmatprep.subr.mxu0 0.0
    %1969 = vmatpush1.msra.mxu0 0.0
    %1970 = vmatprep.subr.mxu0 0.0
    %1971 = vmatpush1.msra.mxu0 0.0
    %1972 = vmatprep.subr.mxu0 0.0
    %1973 = vmatpush1.msra.mxu0 0.0
    %1974 = vmatprep.subr.mxu0 0.0
    %1975 = vmatpush1.msra.mxu0 0.0
    %1976 = vmatprep.subr.mxu0 0.0
    %1977 = vmatpush1.msra.mxu0 0.0
    %1978 = vmatprep.subr.mxu0 0.0
    %1979 = vmatpush1.msra.mxu0 0.0
    %1980 = vmatprep.subr.mxu0 0.0
    %1981 = vmatpush1.msra.mxu0 0.0
    %1982 = vmatprep.subr.mxu0 0.0
    %1983 = vmatpush1.msra.mxu0 0.0
    %1984 = vmatprep.subr.mxu0 0.0
    %1985 = vmatpush1.msra.mxu0 0.0
    %1986 = vmatprep.subr.mxu0 0.0
    %1987 = vmatpush1.msra.mxu0 0.0
    %1988 = vmatprep.subr.mxu0 0.0
    %1989 = vmatpush1.msra.mxu0 0.0
    %1990 = vmatprep.subr.mxu0 0.0
    %1991 = vmatpush1.msra.mxu0 0.0
    %1992 = vmatprep.subr.mxu0 0.0
    %1993 = vmatpush1.msra.mxu0 0.0
    %1994 = vmatprep.subr.mxu0 0.0
    %1995 = vmatpush1.msra.mxu0 0.0
    %1996 = vmatprep.subr.mxu0 0.0
    %1997 = vmatpush1.msra.mxu0 0.0
    %1998 = vmatprep.subr.mxu0 0.0
    %1999 = vmatpush1.msra.mxu0 0.0
    %2000 = vmatprep.subr.mxu0 0.0
    %2001 = vmatpush1.msra.mxu0 0.0
    %2002 = vmatprep.subr.mxu0 0.0
    %2003 = vmatpush1.msra.mxu0 0.0
    %2004 = vmatprep.subr.mxu0 0.0
    %2005 = vmatpush1.msra.mxu0 0.0
    %2006 = vmatprep.subr.mxu0 0.0
    %2007 = vmatpush1.msra.mxu0 0.0
    %2008 = vmatprep.subr.mxu0 0.0
    %2009 = vmatpush1.msra.mxu0 0.0
    %2010 = vmatprep.subr.mxu0 0.0
    %2011 = vmatpush1.msra.mxu0 0.0
    %2012 = vmatprep.subr.mxu0 0.0
    %2013 = vmatpush1.msra.mxu0 0.0
    %2014 = vmatprep.subr.mxu0 0.0
    %2015 = vmatpush1.msra.mxu0 0.0
    %2016 = vmatprep.mubr.f32.mxu0 0.0
    %2017 = vmatmul.mubr.f32.gmra.mrb[0].mxu0 %v1950
    %v2018 = vpop.f32.mrb[0].mxu0
    %v2019 = vadd.f32 0.0, %v2018
    %v2020 = vpop.f32.mrb[0].mxu0
    %2021 = vdwg.mxu0
    %v2022 = vadd.f32 %v1944, %v2019
    %v2023 = vxor.u32 %v2022, 2147483648
    %v2024 = vmul.f32 %v2023, 1.442695
    %v2025 = vpow.pop %v2024
    %v2026 = vadd.f32 %v2025, 1.0
    %v2027 = vrcp.pop %v2026
    %v2028 = vmul.f32 1.0, %v2027
    %v2029 = vadd.f32 %v2019, %v628
    %2031 = vrot.lane.b32.xlu0 %v2029, 64
    %v2032 = vpop.permute.xlu0 %2031
    %v2034 = vmul.f32 %v2028, %v2032
    %2036 = vrot.lane.b32.xlu0 %v2034, 64
    %v2037 = vpop.permute.xlu0 %2036
    %v2039 = vadd.f32 %v1944, %v2037
    %v2040 = vtanh.pop %v2039
    %v2041 = vsub.f32 1.0, %v2028
    %2043 = vrot.lane.b32.xlu0 %v2040, 96
    %v2044 = vpop.permute.xlu0 %2043
    %v2046 = vmul.f32 %v2041, %v2044
    %v2047 = vmul.f32 %v2028, %v1767
    %v2048 = vadd.f32 %v2046, %v2047
    %v2050 = vrot.slane %v1876, 6
    %2051 = vrot.lane.b32.xlu0 %v2050, 96
    %v2052 = vpop.permute.xlu0 %2051
    %v2053 = vsel %vm164, %v2052, 0
    %2055 = vmatprep.subr.mxu0 0.0
    %2056 = vmatpush1.msra.mxu0 %v17
    %2057 = vmatprep.subr.mxu0 0.0
    %2058 = vmatpush1.msra.mxu0 %v18
    %2059 = vmatprep.subr.mxu0 0.0
    %2060 = vmatpush1.msra.mxu0 %v19
    %2061 = vmatprep.subr.mxu0 0.0
    %2062 = vmatpush1.msra.mxu0 %v20
    %2063 = vmatprep.subr.mxu0 0.0
    %2064 = vmatpush1.msra.mxu0 0.0
    %2065 = vmatprep.subr.mxu0 0.0
    %2066 = vmatpush1.msra.mxu0 0.0
    %2067 = vmatprep.subr.mxu0 0.0
    %2068 = vmatpush1.msra.mxu0 0.0
    %2069 = vmatprep.subr.mxu0 0.0
    %2070 = vmatpush1.msra.mxu0 0.0
    %2071 = vmatprep.subr.mxu0 0.0
    %2072 = vmatpush1.msra.mxu0 0.0
    %2073 = vmatprep.subr.mxu0 0.0
    %2074 = vmatpush1.msra.mxu0 0.0
    %2075 = vmatprep.subr.mxu0 0.0
    %2076 = vmatpush1.msra.mxu0 0.0
    %2077 = vmatprep.subr.mxu0 0.0
    %2078 = vmatpush1.msra.mxu0 0.0
    %2079 = vmatprep.subr.mxu0 0.0
    %2080 = vmatpush1.msra.mxu0 0.0
    %2081 = vmatprep.subr.mxu0 0.0
    %2082 = vmatpush1.msra.mxu0 0.0
    %2083 = vmatprep.subr.mxu0 0.0
    %2084 = vmatpush1.msra.mxu0 0.0
    %2085 = vmatprep.subr.mxu0 0.0
    %2086 = vmatpush1.msra.mxu0 0.0
    %2087 = vmatprep.subr.mxu0 0.0
    %2088 = vmatpush1.msra.mxu0 0.0
    %2089 = vmatprep.subr.mxu0 0.0
    %2090 = vmatpush1.msra.mxu0 0.0
    %2091 = vmatprep.subr.mxu0 0.0
    %2092 = vmatpush1.msra.mxu0 0.0
    %2093 = vmatprep.subr.mxu0 0.0
    %2094 = vmatpush1.msra.mxu0 0.0
    %2095 = vmatprep.subr.mxu0 0.0
    %2096 = vmatpush1.msra.mxu0 0.0
    %2097 = vmatprep.subr.mxu0 0.0
    %2098 = vmatpush1.msra.mxu0 0.0
    %2099 = vmatprep.subr.mxu0 0.0
    %2100 = vmatpush1.msra.mxu0 0.0
    %2101 = vmatprep.subr.mxu0 0.0
    %2102 = vmatpush1.msra.mxu0 0.0
    %2103 = vmatprep.subr.mxu0 0.0
    %2104 = vmatpush1.msra.mxu0 0.0
    %2105 = vmatprep.subr.mxu0 0.0
    %2106 = vmatpush1.msra.mxu0 0.0
    %2107 = vmatprep.subr.mxu0 0.0
    %2108 = vmatpush1.msra.mxu0 0.0
    %2109 = vmatprep.subr.mxu0 0.0
    %2110 = vmatpush1.msra.mxu0 0.0
    %2111 = vmatprep.subr.mxu0 0.0
    %2112 = vmatpush1.msra.mxu0 0.0
    %2113 = vmatprep.subr.mxu0 0.0
    %2114 = vmatpush1.msra.mxu0 0.0
    %2115 = vmatprep.subr.mxu0 0.0
    %2116 = vmatpush1.msra.mxu0 0.0
    %2117 = vmatprep.subr.mxu0 0.0
    %2118 = vmatpush1.msra.mxu0 0.0
    %2119 = vmatprep.mubr.f32.mxu0 0.0
    %2120 = vmatmul.mubr.f32.gmra.mrb[0].mxu0 %v2053
    %v2121 = vpop.f32.mrb[0].mxu0
    %v2122 = vadd.f32 %v49, %v2121
    %v2123 = vpop.f32.mrb[0].mxu0
    %2124 = vdwg.mxu0
    %2126 = vrot.lane.b32.xlu0 %v2048, 96
    %v2127 = vpop.permute.xlu0 %2126
    %v2128 = vsel %vm164, %v2127, 0
    %2130 = vmatprep.subr.mxu0 0.0
    %2131 = vmatpush1.msra.mxu0 %v25
    %2132 = vmatprep.subr.mxu0 0.0
    %2133 = vmatpush1.msra.mxu0 %v26
    %2134 = vmatprep.subr.mxu0 0.0
    %2135 = vmatpush1.msra.mxu0 %v27
    %2136 = vmatprep.subr.mxu0 0.0
    %2137 = vmatpush1.msra.mxu0 %v28
    %2138 = vmatprep.subr.mxu0 0.0
    %2139 = vmatpush1.msra.mxu0 0.0
    %2140 = vmatprep.subr.mxu0 0.0
    %2141 = vmatpush1.msra.mxu0 0.0
    %2142 = vmatprep.subr.mxu0 0.0
    %2143 = vmatpush1.msra.mxu0 0.0
    %2144 = vmatprep.subr.mxu0 0.0
    %2145 = vmatpush1.msra.mxu0 0.0
    %2146 = vmatprep.subr.mxu0 0.0
    %2147 = vmatpush1.msra.mxu0 0.0
    %2148 = vmatprep.subr.mxu0 0.0
    %2149 = vmatpush1.msra.mxu0 0.0
    %2150 = vmatprep.subr.mxu0 0.0
    %2151 = vmatpush1.msra.mxu0 0.0
    %2152 = vmatprep.subr.mxu0 0.0
    %2153 = vmatpush1.msra.mxu0 0.0
    %2154 = vmatprep.subr.mxu0 0.0
    %2155 = vmatpush1.msra.mxu0 0.0
    %2156 = vmatprep.subr.mxu0 0.0
    %2157 = vmatpush1.msra.mxu0 0.0
    %2158 = vmatprep.subr.mxu0 0.0
    %2159 = vmatpush1.msra.mxu0 0.0
    %2160 = vmatprep.subr.mxu0 0.0
    %2161 = vmatpush1.msra.mxu0 0.0
    %2162 = vmatprep.subr.mxu0 0.0
    %2163 = vmatpush1.msra.mxu0 0.0
    %2164 = vmatprep.subr.mxu0 0.0
    %2165 = vmatpush1.msra.mxu0 0.0
    %2166 = vmatprep.subr.mxu0 0.0
    %2167 = vmatpush1.msra.mxu0 0.0
    %2168 = vmatprep.subr.mxu0 0.0
    %2169 = vmatpush1.msra.mxu0 0.0
    %2170 = vmatprep.subr.mxu0 0.0
    %2171 = vmatpush1.msra.mxu0 0.0
    %2172 = vmatprep.subr.mxu0 0.0
    %2173 = vmatpush1.msra.mxu0 0.0
    %2174 = vmatprep.subr.mxu0 0.0
    %2175 = vmatpush1.msra.mxu0 0.0
    %2176 = vmatprep.subr.mxu0 0.0
    %2177 = vmatpush1.msra.mxu0 0.0
    %2178 = vmatprep.subr.mxu0 0.0
    %2179 = vmatpush1.msra.mxu0 0.0
    %2180 = vmatprep.subr.mxu0 0.0
    %2181 = vmatpush1.msra.mxu0 0.0
    %2182 = vmatprep.subr.mxu0 0.0
    %2183 = vmatpush1.msra.mxu0 0.0
    %2184 = vmatprep.subr.mxu0 0.0
    %2185 = vmatpush1.msra.mxu0 0.0
    %2186 = vmatprep.subr.mxu0 0.0
    %2187 = vmatpush1.msra.mxu0 0.0
    %2188 = vmatprep.subr.mxu0 0.0
    %2189 = vmatpush1.msra.mxu0 0.0
    %2190 = vmatprep.subr.mxu0 0.0
    %2191 = vmatpush1.msra.mxu0 0.0
    %2192 = vmatprep.subr.mxu0 0.0
    %2193 = vmatpush1.msra.mxu0 0.0
    %2194 = vmatprep.mubr.f32.mxu0 0.0
    %2195 = vmatmul.mubr.f32.gmra.mrb[0].mxu0 %v2128
    %v2196 = vpop.f32.mrb[0].mxu0
    %v2197 = vadd.f32 0.0, %v2196
    %v2198 = vpop.f32.mrb[0].mxu0
    %2199 = vdwg.mxu0
    %v2200 = vadd.f32 %v2122, %v2197
    %v2201 = vxor.u32 %v2200, 2147483648
    %v2202 = vmul.f32 %v2201, 1.442695
    %v2203 = vpow.pop %v2202
    %v2204 = vadd.f32 %v2203, 1.0
    %v2205 = vrcp.pop %v2204
    %v2206 = vmul.f32 1.0, %v2205
    %v2207 = vadd.f32 %v2197, %v628
    %2209 = vrot.lane.b32.xlu0 %v2207, 64
    %v2210 = vpop.permute.xlu0 %2209
    %v2212 = vmul.f32 %v2206, %v2210
    %2214 = vrot.lane.b32.xlu0 %v2212, 64
    %v2215 = vpop.permute.xlu0 %2214
    %v2217 = vadd.f32 %v2122, %v2215
    %v2218 = vtanh.pop %v2217
    %v2219 = vsub.f32 1.0, %v2206
    %2221 = vrot.lane.b32.xlu0 %v2218, 96
    %v2222 = vpop.permute.xlu0 %2221
    %v2224 = vmul.f32 %v2219, %v2222
    %v2225 = vmul.f32 %v2206, %v2048
    %v2226 = vadd.f32 %v2224, %v2225
    %v2227 = vlaneseq
    %v2228 = vshrl.u32 %v2227, 7
    %v2229 = vsub.s32 2, %v2228
    %v2230 = vrot.slane %v45, %v2229
    %2232 = vrot.lane.b32.xlu0 %v2226, 96
    %v2233 = vpop.permute.xlu0 %2232
    %v2234 = vsel %vm164, %v2233, 0
    %2236 = vmatprep.subr.mxu0 0.0
    %2237 = vmatpush1.msra.mxu0 %v29
    %2238 = vmatprep.subr.mxu0 0.0
    %2239 = vmatpush1.msra.mxu0 %v30
    %2240 = vmatprep.subr.mxu0 0.0
    %2241 = vmatpush1.msra.mxu0 %v31
    %2242 = vmatprep.subr.mxu0 0.0
    %2243 = vmatpush1.msra.mxu0 %v32
    %2244 = vmatprep.subr.mxu0 0.0
    %2245 = vmatpush1.msra.mxu0 0.0
    %2246 = vmatprep.subr.mxu0 0.0
    %2247 = vmatpush1.msra.mxu0 0.0
    %2248 = vmatprep.subr.mxu0 0.0
    %2249 = vmatpush1.msra.mxu0 0.0
    %2250 = vmatprep.subr.mxu0 0.0
    %2251 = vmatpush1.msra.mxu0 0.0
    %2252 = vmatprep.subr.mxu0 0.0
    %2253 = vmatpush1.msra.mxu0 0.0
    %2254 = vmatprep.subr.mxu0 0.0
    %2255 = vmatpush1.msra.mxu0 0.0
    %2256 = vmatprep.subr.mxu0 0.0
    %2257 = vmatpush1.msra.mxu0 0.0
    %2258 = vmatprep.subr.mxu0 0.0
    %2259 = vmatpush1.msra.mxu0 0.0
    %2260 = vmatprep.subr.mxu0 0.0
    %2261 = vmatpush1.msra.mxu0 0.0
    %2262 = vmatprep.subr.mxu0 0.0
    %2263 = vmatpush1.msra.mxu0 0.0
    %2264 = vmatprep.subr.mxu0 0.0
    %2265 = vmatpush1.msra.mxu0 0.0
    %2266 = vmatprep.subr.mxu0 0.0
    %2267 = vmatpush1.msra.mxu0 0.0
    %2268 = vmatprep.subr.mxu0 0.0
    %2269 = vmatpush1.msra.mxu0 0.0
    %2270 = vmatprep.subr.mxu0 0.0
    %2271 = vmatpush1.msra.mxu0 0.0
    %2272 = vmatprep.subr.mxu0 0.0
    %2273 = vmatpush1.msra.mxu0 0.0
    %2274 = vmatprep.subr.mxu0 0.0
    %2275 = vmatpush1.msra.mxu0 0.0
    %2276 = vmatprep.subr.mxu0 0.0
    %2277 = vmatpush1.msra.mxu0 0.0
    %2278 = vmatprep.subr.mxu0 0.0
    %2279 = vmatpush1.msra.mxu0 0.0
    %2280 = vmatprep.subr.mxu0 0.0
    %2281 = vmatpush1.msra.mxu0 0.0
    %2282 = vmatprep.subr.mxu0 0.0
    %2283 = vmatpush1.msra.mxu0 0.0
    %2284 = vmatprep.subr.mxu0 0.0
    %2285 = vmatpush1.msra.mxu0 0.0
    %2286 = vmatprep.subr.mxu0 0.0
    %2287 = vmatpush1.msra.mxu0 0.0
    %2288 = vmatprep.subr.mxu0 0.0
    %2289 = vmatpush1.msra.mxu0 0.0
    %2290 = vmatprep.subr.mxu0 0.0
    %2291 = vmatpush1.msra.mxu0 0.0
    %2292 = vmatprep.subr.mxu0 0.0
    %2293 = vmatpush1.msra.mxu0 0.0
    %2294 = vmatprep.subr.mxu0 0.0
    %2295 = vmatpush1.msra.mxu0 0.0
    %2296 = vmatprep.subr.mxu0 0.0
    %2297 = vmatpush1.msra.mxu0 0.0
    %2298 = vmatprep.subr.mxu0 0.0
    %2299 = vmatpush1.msra.mxu0 0.0
    %2300 = vmatprep.mubr.f32.mxu0 0.0
    %2301 = vmatmul.mubr.f32.gmra.mrb[0].mxu0 %v2234
    %v2302 = vpop.f32.mrb[0].mxu0
    %v2303 = vadd.f32 %v2230, %v2302
    %v2304 = vpop.f32.mrb[0].mxu0
    %2305 = vdwg.mxu0
    %v2306 = vmax.f32 %v2303, 0.0
    %2308 = vrot.lane.b32.xlu0 %v2230, 64
    %v2309 = vpop.permute.xlu0 %2308
    %vm2311 = vcmask 523264
    %v2313 = vsel %vm2311, %v2306, 0
    %2315 = vmatprep.subr.mxu0 0.0
    %2316 = vmatpush1.msra.mxu0 %v33
    %2317 = vmatprep.subr.mxu0 0.0
    %2318 = vmatpush1.msra.mxu0 %v34
    %2319 = vmatprep.subr.mxu0 0.0
    %2320 = vmatpush1.msra.mxu0 %v35
    %2321 = vmatprep.subr.mxu0 0.0
    %2322 = vmatpush1.msra.mxu0 %v36
    %2323 = vmatprep.subr.mxu0 0.0
    %2324 = vmatpush1.msra.mxu0 %v37
    %2325 = vmatprep.subr.mxu0 0.0
    %2326 = vmatpush1.msra.mxu0 %v38
    %2327 = vmatprep.subr.mxu0 0.0
    %2328 = vmatpush1.msra.mxu0 %v39
    %2329 = vmatprep.subr.mxu0 0.0
    %2330 = vmatpush1.msra.mxu0 %v40
    %2331 = vmatprep.subr.mxu0 0.0
    %2332 = vmatpush1.msra.mxu0 0.0
    %2333 = vmatprep.subr.mxu0 0.0
    %2334 = vmatpush1.msra.mxu0 0.0
    %2335 = vmatprep.subr.mxu0 0.0
    %2336 = vmatpush1.msra.mxu0 0.0
    %2337 = vmatprep.subr.mxu0 0.0
    %2338 = vmatpush1.msra.mxu0 0.0
    %2339 = vmatprep.subr.mxu0 0.0
    %2340 = vmatpush1.msra.mxu0 0.0
    %2341 = vmatprep.subr.mxu0 0.0
    %2342 = vmatpush1.msra.mxu0 0.0
    %2343 = vmatprep.subr.mxu0 0.0
    %2344 = vmatpush1.msra.mxu0 0.0
    %2345 = vmatprep.subr.mxu0 0.0
    %2346 = vmatpush1.msra.mxu0 0.0
    %2347 = vmatprep.subr.mxu0 0.0
    %2348 = vmatpush1.msra.mxu0 0.0
    %2349 = vmatprep.subr.mxu0 0.0
    %2350 = vmatpush1.msra.mxu0 0.0
    %2351 = vmatprep.subr.mxu0 0.0
    %2352 = vmatpush1.msra.mxu0 0.0
    %2353 = vmatprep.subr.mxu0 0.0
    %2354 = vmatpush1.msra.mxu0 0.0
    %2355 = vmatprep.subr.mxu0 0.0
    %2356 = vmatpush1.msra.mxu0 0.0
    %2357 = vmatprep.subr.mxu0 0.0
    %2358 = vmatpush1.msra.mxu0 0.0
    %2359 = vmatprep.subr.mxu0 0.0
    %2360 = vmatpush1.msra.mxu0 0.0
    %2361 = vmatprep.subr.mxu0 0.0
    %2362 = vmatpush1.msra.mxu0 0.0
    %2363 = vmatprep.subr.mxu0 0.0
    %2364 = vmatpush1.msra.mxu0 0.0
    %2365 = vmatprep.subr.mxu0 0.0
    %2366 = vmatpush1.msra.mxu0 0.0
    %2367 = vmatprep.subr.mxu0 0.0
    %2368 = vmatpush1.msra.mxu0 0.0
    %2369 = vmatprep.subr.mxu0 0.0
    %2370 = vmatpush1.msra.mxu0 0.0
    %2371 = vmatprep.subr.mxu0 0.0
    %2372 = vmatpush1.msra.mxu0 0.0
    %2373 = vmatprep.subr.mxu0 0.0
    %2374 = vmatpush1.msra.mxu0 0.0
    %2375 = vmatprep.subr.mxu0 0.0
    %2376 = vmatpush1.msra.mxu0 0.0
    %2377 = vmatprep.subr.mxu0 0.0
    %2378 = vmatpush1.msra.mxu0 0.0
    %2379 = vmatprep.mubr.f32.mxu0 0.0
    %2380 = vmatmul.mubr.f32.gmra.mrb[0].mxu0 %v2313
    %v2381 = vpop.f32.mrb[0].mxu0
    %v2382 = vadd.f32 %v2309, %v2381
    %v2383 = vpop.f32.mrb[0].mxu0
    %2384 = vdwg.mxu0
    %v2385 = vmax.f32 %v2382, 0.0
    %2386 = vrot.lane.b32.xlu0 %v2230, 32
    %v2387 = vpop.permute.xlu0 %2386
    %v2390 = vsel %vm164, %v2385, 0
    %2392 = vmatprep.subr.mxu0 0.0
    %2393 = vmatpush1.msra.mxu0 %v41
    %2394 = vmatprep.subr.mxu0 0.0
    %2395 = vmatpush1.msra.mxu0 %v42
    %2396 = vmatprep.subr.mxu0 0.0
    %2397 = vmatpush1.msra.mxu0 %v43
    %2398 = vmatprep.subr.mxu0 0.0
    %2399 = vmatpush1.msra.mxu0 %v44
    %2400 = vmatprep.subr.mxu0 0.0
    %2401 = vmatpush1.msra.mxu0 0.0
    %2402 = vmatprep.subr.mxu0 0.0
    %2403 = vmatpush1.msra.mxu0 0.0
    %2404 = vmatprep.subr.mxu0 0.0
    %2405 = vmatpush1.msra.mxu0 0.0
    %2406 = vmatprep.subr.mxu0 0.0
    %2407 = vmatpush1.msra.mxu0 0.0
    %2408 = vmatprep.subr.mxu0 0.0
    %2409 = vmatpush1.msra.mxu0 0.0
    %2410 = vmatprep.subr.mxu0 0.0
    %2411 = vmatpush1.msra.mxu0 0.0
    %2412 = vmatprep.subr.mxu0 0.0
    %2413 = vmatpush1.msra.mxu0 0.0
    %2414 = vmatprep.subr.mxu0 0.0
    %2415 = vmatpush1.msra.mxu0 0.0
    %2416 = vmatprep.subr.mxu0 0.0
    %2417 = vmatpush1.msra.mxu0 0.0
    %2418 = vmatprep.subr.mxu0 0.0
    %2419 = vmatpush1.msra.mxu0 0.0
    %2420 = vmatprep.subr.mxu0 0.0
    %2421 = vmatpush1.msra.mxu0 0.0
    %2422 = vmatprep.subr.mxu0 0.0
    %2423 = vmatpush1.msra.mxu0 0.0
    %2424 = vmatprep.subr.mxu0 0.0
    %2425 = vmatpush1.msra.mxu0 0.0
    %2426 = vmatprep.subr.mxu0 0.0
    %2427 = vmatpush1.msra.mxu0 0.0
    %2428 = vmatprep.subr.mxu0 0.0
    %2429 = vmatpush1.msra.mxu0 0.0
    %2430 = vmatprep.subr.mxu0 0.0
    %2431 = vmatpush1.msra.mxu0 0.0
    %2432 = vmatprep.subr.mxu0 0.0
    %2433 = vmatpush1.msra.mxu0 0.0
    %2434 = vmatprep.subr.mxu0 0.0
    %2435 = vmatpush1.msra.mxu0 0.0
    %2436 = vmatprep.subr.mxu0 0.0
    %2437 = vmatpush1.msra.mxu0 0.0
    %2438 = vmatprep.subr.mxu0 0.0
    %2439 = vmatpush1.msra.mxu0 0.0
    %2440 = vmatprep.subr.mxu0 0.0
    %2441 = vmatpush1.msra.mxu0 0.0
    %2442 = vmatprep.subr.mxu0 0.0
    %2443 = vmatpush1.msra.mxu0 0.0
    %2444 = vmatprep.subr.mxu0 0.0
    %2445 = vmatpush1.msra.mxu0 0.0
    %2446 = vmatprep.subr.mxu0 0.0
    %2447 = vmatpush1.msra.mxu0 0.0
    %2448 = vmatprep.subr.mxu0 0.0
    %2449 = vmatpush1.msra.mxu0 0.0
    %2450 = vmatprep.subr.mxu0 0.0
    %2451 = vmatpush1.msra.mxu0 0.0
    %2452 = vmatprep.subr.mxu0 0.0
    %2453 = vmatpush1.msra.mxu0 0.0
    %2454 = vmatprep.subr.mxu0 0.0
    %2455 = vmatpush1.msra.mxu0 0.0
    %2456 = vmatprep.mubr.f32.mxu0 0.0
    %2457 = vmatmul.mubr.f32.gmra.mrb[0].mxu0 %v2390
    %v2458 = vpop.f32.mrb[0].mxu0
    %v2459 = vadd.f32 %v2387, %v2458
    %v2460 = vpop.f32.mrb[0].mxu0
    %2461 = vdwg.mxu0
    %vm2462 = vcmask 25600
    %2463 = vst.msk [vmem:[#allocation2] sm:$0x3] %vm2462, %v2459
    // Predicated region
    $region14: #{grunet_forward.1} parent=1 // pred_check
      _
    $region15: #{grunet_forward.1} parent=1 // pred_check_branch
      %2465 = sbr.rel (0) target = $region17
    $region16: #{grunet_forward.1} parent=1 // pred_region
      %s2467 = ssub.s32 32, 32
      %2468 = vsyncadd [#allocation3], %s2467
      %s2470 = sshll.u32 [#allocation2], 4
      %s2471 = int_to_ptr.vmem [resolvable:$true] %s2470
      %2473 = dma.vmem_to_hbm [thread:$0]  %s2471, 32, %s3, [#allocation3]
    $region17: #{grunet_forward.1} parent=1 // pred_fallthru
      _
    // Predicated region
    $region18: #{grunet_forward.1} parent=1 // pred_check
      _
    $region19: #{grunet_forward.1} parent=1 // pred_check_branch
      %2475 = sbr.rel (0) target = $region21
    $region20: #{grunet_forward.1} parent=1 // pred_region
      %2476 = dma.done [#allocation3], 32
    $region21: #{grunet_forward.1} parent=1 // pred_fallthru
      _
    %2477 = vsyncpa [#allocation3], 1

</llo_original>
